<compile_context>
chip_gen: v5e
topology: v5e:2x2
jax: 0.10.0
libtpu: 0.0.40
codegen_flags: <defaults>
</compile_context>

<pallas_src>
import functools
import math

import jax
import jax.numpy as jnp
from jax import lax
from jax.experimental import pallas as pl
from jax.experimental.pallas import tpu as pltpu

MODEL_DIM = 32
N_HEAD = 4            # module default nhead=5 does not divide model_dim=32; use 4
D_FFN = 2048
LN_EPS = 1e-5
NEG_INF = -1e30

VMEM_SPEC = pl.BlockSpec(memory_space=pltpu.MemorySpace.VMEM)


# ---------------------------------------------------------------------------
# In-kernel helpers (values already resident in VMEM / vregs)
# ---------------------------------------------------------------------------
def _layer_norm(x, w, b):
    mu = jnp.mean(x, axis=-1, keepdims=True)
    var = jnp.mean(jnp.square(x - mu), axis=-1, keepdims=True)
    return (x - mu) * lax.rsqrt(var + LN_EPS) * w + b


def _mha(q, k, v, bias_rep, blk, wo, bo, scale, nhead):
    """All-heads attention without a per-head loop.

    q: [M, E], k/v: [N, E]
    bias_rep: [M, nhead*N]  additive score bias (cross-batch + key padding),
                            tiled once per head in the wrapper.
    blk:      [nhead*N, E]  head-block mask, blk[h*N+n, e] = 1 iff e//d == h.
    Output: [M, E] (heads concatenated along lanes) @ Wo + bo.
    """
    kk = jnp.concatenate([k] * nhead, axis=0) * blk          # [H*N, E]
    vv = jnp.concatenate([v] * nhead, axis=0) * blk          # [H*N, E]
    # scores[m, h*N+n] = <q_h[m], k_h[n]>  (contract last axes, no transpose)
    s = lax.dot_general(q, kk, (((1,), (1,)), ((), ())),
                        preferred_element_type=jnp.float32)
    s = s * scale + bias_rep                                  # [M, H*N]
    m = jnp.max(s, axis=-1, keepdims=True)                    # per-row max (softmax-invariant)
    p = jnp.exp(s - m)                                        # masked cols -> exactly 0
    o = jnp.dot(p, vv, preferred_element_type=jnp.float32)    # [M, E] concat-head numerators
    l = jnp.dot(p, blk, preferred_element_type=jnp.float32)   # per-head denominators -> [M, E]
    o = o * pl.reciprocal(l, approx=True)
    return jnp.dot(o, wo, preferred_element_type=jnp.float32) + bo


# ---------------------------------------------------------------------------
# The single fused kernel: one TransformerDecoderLayer forward pass
# ---------------------------------------------------------------------------
def _decoder_layer_kernel(acts_ref, attn_w_ref, vecs_ref, blk_ref,
                          sa_bias_ref, ca_bias_ref,
                          lin1_w_ref, lin1_b_ref, lin2_w_ref,
                          out_ref, *, nhead, q_len, s_len, bsz):
    e = acts_ref.shape[-1]
    d = e // nhead
    scale = 1.0 / math.sqrt(d)
    m_rows = bsz * q_len          # flattened query rows
    n_rows = bsz * s_len          # flattened memory rows

    def w(i):                     # packed [E, E] weight block (sublane-aligned rows)
        return attn_w_ref[i * e:(i + 1) * e, :]

    def vec(i):                   # packed [1, E] bias / LN vector row
        return vecs_ref[i:i + 1, :]

    tgt = acts_ref[0:m_rows, :]
    qp = acts_ref[m_rows:2 * m_rows, :]
    mem = acts_ref[2 * m_rows:2 * m_rows + n_rows, :]
    pos = acts_ref[2 * m_rows + n_rows:2 * m_rows + 2 * n_rows, :]

    blk_self = blk_ref[0:nhead * m_rows, :]
    blk_cross = blk_ref[nhead * m_rows:nhead * (m_rows + n_rows), :]

    # ---- self-attention: Q and K share (tgt + query_pos) -------------------
    qk_in = tgt + qp
    q_sa = jnp.dot(qk_in, w(0), preferred_element_type=jnp.float32) + vec(0)
    k_sa = jnp.dot(qk_in, w(1), preferred_element_type=jnp.float32) + vec(1)
    v_sa = jnp.dot(tgt, w(2), preferred_element_type=jnp.float32) + vec(2)
    sa = _mha(q_sa, k_sa, v_sa, sa_bias_ref[...], blk_self, w(3), vec(3),
              scale, nhead)
    x = _layer_norm(tgt + sa, vec(9), vec(10))              # dropout == identity

    # ---- cross-attention over memory (+pos), key_padding_mask in bias ------
    q_ca = jnp.dot(x + qp, w(4), preferred_element_type=jnp.float32) + vec(4)
    k_ca = jnp.dot(mem + pos, w(5), preferred_element_type=jnp.float32) + vec(5)
    v_ca = jnp.dot(mem, w(6), preferred_element_type=jnp.float32) + vec(6)
    ca = _mha(q_ca, k_ca, v_ca, ca_bias_ref[...], blk_cross, w(7), vec(7),
              scale, nhead)
    x = _layer_norm(x + ca, vec(11), vec(12))

    # ---- feed-forward: [M, d_ffn] hidden never leaves VMEM -----------------
    h = jnp.dot(x, lin1_w_ref[...],
                preferred_element_type=jnp.float32) + lin1_b_ref[...]
    h = jnp.maximum(h, 0.0)                                   # ReLU
    y = jnp.dot(h, lin2_w_ref[...],
                preferred_element_type=jnp.float32) + vec(8)
    x = _layer_norm(x + y, vec(13), vec(14))

    out_ref[...] = x.astype(out_ref.dtype)


# ---------------------------------------------------------------------------
# Wrapper: layout plumbing + single pallas_call
# ---------------------------------------------------------------------------
def transformer_decoder_layer(tgt, memory, params, *, nhead=N_HEAD,
                              memory_key_padding_mask=None, pos=None,
                              query_pos=None):
    """Matches TransformerDecoderLayer.forward (seq-first [L, B, E] tensors).

    # TODO(synk): attn_mask (tgt_mask / memory_mask) is not implemented —
    # only key_padding_mask, matching the DETR call pattern where they are None.
    """
    q_len, bsz, e = tgt.shape
    s_len = memory.shape[0]
    d = e // nhead
    m_rows = bsz * q_len
    n_rows = bsz * s_len
    f32 = jnp.float32

    pos = jnp.zeros_like(memory) if pos is None else pos
    query_pos = jnp.zeros_like(tgt) if query_pos is None else query_pos
    if memory_key_padding_mask is None:
        memory_key_padding_mask = jnp.zeros((bsz, s_len), bool)

    def flat(x):                          # [L, B, E] -> [B*L, E], row = b*L + l
        return jnp.transpose(x, (1, 0, 2)).reshape(-1, e).astype(f32)

    # One activation slab: tgt | query_pos | memory | pos (all sublane-aligned).
    acts = jnp.concatenate([flat(tgt), flat(query_pos), flat(memory), flat(pos)],
                           axis=0)

    p = params

    # Attention weights pre-split (no in-kernel lane slicing) and packed [8E, E].
    def split_qkv(win):                   # torch in_proj_weight [3E, E]
        return win[:e].T, win[e:2 * e].T, win[2 * e:].T
    sa_q, sa_k, sa_v = split_qkv(p["self_attn"]["in_proj_w"])
    ca_q, ca_k, ca_v = split_qkv(p["cross_attn"]["in_proj_w"])
    attn_w = jnp.concatenate(
        [sa_q, sa_k, sa_v, p["self_attn"]["out_w"].T,
         ca_q, ca_k, ca_v, p["cross_attn"]["out_w"].T], axis=0).astype(f32)

    # All small bias / LayerNorm vectors packed into one [16, E] slab.
    sb, cb = p["self_attn"]["in_proj_b"], p["cross_attn"]["in_proj_b"]
    vec_rows = [sb[:e], sb[e:2 * e], sb[2 * e:], p["self_attn"]["out_b"],
                cb[:e], cb[e:2 * e], cb[2 * e:], p["cross_attn"]["out_b"],
                p["lin2_b"],
                p["norm1_w"], p["norm1_b"], p["norm2_w"], p["norm2_b"],
                p["norm3_w"], p["norm3_b"], jnp.zeros((e,), f32)]
    vecs = jnp.stack([r.astype(f32) for r in vec_rows], axis=0)

    # Head-block masks: blk[h*R + r, e] = 1 iff e // d == h  (self then cross).
    head_of_col = jnp.arange(e) // d
    def blk_mask(rows):
        head_of_row = jnp.arange(nhead * rows) // rows
        return (head_of_row[:, None] == head_of_col[None, :]).astype(f32)
    blk = jnp.concatenate([blk_mask(m_rows), blk_mask(n_rows)], axis=0)

    # Additive score biases (cross-batch block-diag [+ key padding]), per head.
    qb = jnp.arange(m_rows) // q_len
    same_self = qb[:, None] == qb[None, :]
    sa_bias = jnp.tile(jnp.where(same_self, 0.0, NEG_INF).astype(f32), (1, nhead))

    kb = jnp.arange(n_rows) // s_len
    pad = memory_key_padding_mask.reshape(-1)
    allowed = (qb[:, None] == kb[None, :]) & jnp.logical_not(pad)[None, :]
    ca_bias = jnp.tile(jnp.where(allowed, 0.0, NEG_INF).astype(f32), (1, nhead))

    lin1_w = p["lin1_w"].T.astype(f32)                  # [E, dff]
    lin1_b = p["lin1_b"].reshape(1, -1).astype(f32)     # [1, dff]
    lin2_w = p["lin2_w"].T.astype(f32)                  # [dff, E]

    args = (acts, attn_w, vecs, blk, sa_bias, ca_bias, lin1_w, lin1_b, lin2_w)
    kernel = functools.partial(_decoder_layer_kernel, nhead=nhead,
                               q_len=q_len, s_len=s_len, bsz=bsz)
    out_flat = pl.pallas_call(
        kernel,
        out_shape=jax.ShapeDtypeStruct((m_rows, e), tgt.dtype),
        in_specs=[VMEM_SPEC] * len(args),
        out_specs=VMEM_SPEC,
    )(*args)
    return jnp.transpose(out_flat.reshape(bsz, q_len, e), (1, 0, 2))  # [Q, B, E]


# ---------------------------------------------------------------------------
# Pure-JAX reference (mirrors PyTorch nn.MultiheadAttention / LayerNorm math)
# ---------------------------------------------------------------------------
def _reference_decoder_layer(tgt, memory, params, mask, pos, query_pos,
                             nhead=N_HEAD):
    hi = jax.lax.Precision.HIGHEST

    def mha(q_in, k_in, v_in, p, key_padding_mask):
        lq, b, e = q_in.shape
        lk = k_in.shape[0]
        d = e // nhead
        wq, wk, wv = (p["in_proj_w"][:e], p["in_proj_w"][e:2 * e],
                      p["in_proj_w"][2 * e:])
        bq, bk, bv = (p["in_proj_b"][:e], p["in_proj_b"][e:2 * e],
                      p["in_proj_b"][2 * e:])
        q = jnp.einsum("lbe,fe->lbf", q_in, wq, precision=hi) + bq
        k = jnp.einsum("lbe,fe->lbf", k_in, wk, precision=hi) + bk
        v = jnp.einsum("lbe,fe->lbf", v_in, wv, precision=hi) + bv
        q = q.reshape(lq, b, nhead, d).transpose(1, 2, 0, 3)
        k = k.reshape(lk, b, nhead, d).transpose(1, 2, 0, 3)
        v = v.reshape(lk, b, nhead, d).transpose(1, 2, 0, 3)
        s = jnp.einsum("bhqd,bhkd->bhqk", q, k, precision=hi) / math.sqrt(d)
        if key_padding_mask is not None:
            s = s + jnp.where(key_padding_mask, NEG_INF, 0.0)[:, None, None, :]
        a = jax.nn.softmax(s, axis=-1)
        o = jnp.einsum("bhqk,bhkd->bhqd", a, v, precision=hi)
        o = o.transpose(2, 0, 1, 3).reshape(lq, b, e)
        return jnp.einsum("lbe,fe->lbf", o, p["out_w"], precision=hi) + p["out_b"]

    def ln(x, w, b):
        mu = x.mean(-1, keepdims=True)
        var = ((x - mu) ** 2).mean(-1, keepdims=True)
        return (x - mu) / jnp.sqrt(var + LN_EPS) * w + b

    q = k = tgt + query_pos
    t = ln(tgt + mha(q, k, tgt, params["self_attn"], None),
           params["norm1_w"], params["norm1_b"])
    t2 = mha(t + query_pos, memory + pos, memory, params["cross_attn"], mask)
    t = ln(t + t2, params["norm2_w"], params["norm2_b"])
    h = jax.nn.relu(jnp.einsum("lbe,fe->lbf", t, params["lin1_w"],
                               precision=hi) + params["lin1_b"])
    t2 = jnp.einsum("lbf,ef->lbe", h, params["lin2_w"],
                    precision=hi) + params["lin2_b"]
    return ln(t + t2, params["norm3_w"], params["norm3_b"])


# ---------------------------------------------------------------------------
# Deterministic parameter init (PyTorch weight layouts)
# ---------------------------------------------------------------------------
def _init_mha(key, e):
    k1, k2, k3, k4 = jax.random.split(key, 4)
    return {
        "in_proj_w": 0.05 * jax.random.normal(k1, (3 * e, e), jnp.float32),
        "in_proj_b": 0.02 * jax.random.normal(k2, (3 * e,), jnp.float32),
        "out_w": 0.05 * jax.random.normal(k3, (e, e), jnp.float32),
        "out_b": 0.02 * jax.random.normal(k4, (e,), jnp.float32),
    }


def init_params(key, e=MODEL_DIM, dff=D_FFN):
    keys = jax.random.split(key, 6)
    ones = jnp.ones((e,), jnp.float32)
    zeros = jnp.zeros((e,), jnp.float32)
    return {
        "self_attn": _init_mha(keys[0], e),
        "cross_attn": _init_mha(keys[1], e),
        "lin1_w": 0.05 * jax.random.normal(keys[2], (dff, e), jnp.float32),
        "lin1_b": 0.02 * jax.random.normal(keys[3], (dff,), jnp.float32),
        "lin2_w": 0.05 * jax.random.normal(keys[4], (e, dff), jnp.float32),
        "lin2_b": 0.02 * jax.random.normal(keys[5], (e,), jnp.float32),
        "norm1_w": ones, "norm1_b": zeros,
        "norm2_w": ones, "norm2_b": zeros,
        "norm3_w": ones, "norm3_b": zeros,
    }


# ---------------------------------------------------------------------------
if __name__ == "__main__":
    key = jax.random.PRNGKey(0)
    k_tgt, k_mem, k_pos, k_qp, k_par = jax.random.split(key, 5)

    Q, S, B, E = 8, 16, 2, MODEL_DIM        # queries, memory length, batch, model dim

    tgt = jax.random.normal(k_tgt, (Q, B, E), jnp.float32)
    memory = jax.random.normal(k_mem, (S, B, E), jnp.float32)
    pos = jax.random.normal(k_pos, (S, B, E), jnp.float32)
    query_pos = jax.random.normal(k_qp, (Q, B, E), jnp.float32)
    # key-padding mask: True = padded/ignored; pad last 4 memory positions of batch 1
    mask = jnp.zeros((B, S), dtype=bool).at[1, S - 4:].set(True)

    params = init_params(k_par)

    @jax.jit
    def fwd(tgt, memory, params, mask, pos, query_pos):
        return transformer_decoder_layer(
            tgt, memory, params,
            memory_key_padding_mask=mask, pos=pos, query_pos=query_pos)

    out = fwd(tgt, memory, params, mask, pos, query_pos)
    jax.block_until_ready(out)

    ref = _reference_decoder_layer(tgt, memory, params, mask, pos, query_pos)
    jax.block_until_ready(ref)

    assert out.shape == (Q, B, E), out.shape
    assert bool(jnp.all(jnp.isfinite(out)))
    max_err = float(jnp.max(jnp.abs(out - ref)))
    assert max_err < 2e-3, f"max |err| = {max_err}"
    print("KERNEL_OK")
</pallas_src>

<mosaic_0001>
module attributes {stable_mosaic.version = 11 : i64} {
  func.func @_decoder_layer_kernel(%arg0: memref<96x32xf32, #tpu.memory_space<vmem>>, %arg1: memref<256x32xf32, #tpu.memory_space<vmem>>, %arg2: memref<16x32xf32, #tpu.memory_space<vmem>>, %arg3: memref<192x32xf32, #tpu.memory_space<vmem>>, %arg4: memref<16x64xf32, #tpu.memory_space<vmem>>, %arg5: memref<16x128xf32, #tpu.memory_space<vmem>>, %arg6: memref<32x2048xf32, #tpu.memory_space<vmem>>, %arg7: memref<1x2048xf32, #tpu.memory_space<vmem>>, %arg8: memref<2048x32xf32, #tpu.memory_space<vmem>>, %arg9: memref<16x32xf32, #tpu.memory_space<vmem>>) attributes {dimension_semantics = [], scalar_prefetch = 0 : i64, scratch_operands = 0 : i64, tpu.core_type = #tpu.core_type<tc>} {
    %c0 = arith.constant 0 : index
    %c0_0 = arith.constant 0 : index
    %0 = vector.load %arg0[%c0, %c0_0] : memref<96x32xf32, #tpu.memory_space<vmem>>, vector<16x32xf32>
    %c16 = arith.constant 16 : index
    %c0_1 = arith.constant 0 : index
    %1 = vector.load %arg0[%c16, %c0_1] : memref<96x32xf32, #tpu.memory_space<vmem>>, vector<16x32xf32>
    %c32 = arith.constant 32 : index
    %c0_2 = arith.constant 0 : index
    %2 = vector.load %arg0[%c32, %c0_2] : memref<96x32xf32, #tpu.memory_space<vmem>>, vector<32x32xf32>
    %c64 = arith.constant 64 : index
    %c0_3 = arith.constant 0 : index
    %3 = vector.load %arg0[%c64, %c0_3] : memref<96x32xf32, #tpu.memory_space<vmem>>, vector<32x32xf32>
    %c0_4 = arith.constant 0 : index
    %c0_5 = arith.constant 0 : index
    %4 = vector.load %arg3[%c0_4, %c0_5] : memref<192x32xf32, #tpu.memory_space<vmem>>, vector<64x32xf32>
    %c64_6 = arith.constant 64 : index
    %c0_7 = arith.constant 0 : index
    %5 = vector.load %arg3[%c64_6, %c0_7] : memref<192x32xf32, #tpu.memory_space<vmem>>, vector<128x32xf32>
    %6 = arith.addf %0, %1 : vector<16x32xf32>
    %c0_8 = arith.constant 0 : index
    %c0_9 = arith.constant 0 : index
    %7 = vector.load %arg1[%c0_8, %c0_9] : memref<256x32xf32, #tpu.memory_space<vmem>>, vector<32x32xf32>
    %cst = arith.constant dense<0.000000e+00> : vector<16x32xf32>
    %8 = tpu.matmul %6, %7, %cst {dimension_numbers = #tpu.dot_dimension_numbers<[1], [0], [0], [1], [0, 0, 1, 1], [], []>} : vector<16x32xf32>, vector<32x32xf32>, vector<16x32xf32> -> vector<16x32xf32>
    %c0_10 = arith.constant 0 : index
    %c0_11 = arith.constant 0 : index
    %9 = vector.load %arg2[%c0_10, %c0_11] : memref<16x32xf32, #tpu.memory_space<vmem>>, vector<1x32xf32>
    %10 = vector.broadcast %9 : vector<1x32xf32> to vector<16x32xf32>
    %11 = arith.addf %8, %10 : vector<16x32xf32>
    %c32_12 = arith.constant 32 : index
    %c0_13 = arith.constant 0 : index
    %12 = vector.load %arg1[%c32_12, %c0_13] : memref<256x32xf32, #tpu.memory_space<vmem>>, vector<32x32xf32>
    %cst_14 = arith.constant dense<0.000000e+00> : vector<16x32xf32>
    %13 = tpu.matmul %6, %12, %cst_14 {dimension_numbers = #tpu.dot_dimension_numbers<[1], [0], [0], [1], [0, 0, 1, 1], [], []>} : vector<16x32xf32>, vector<32x32xf32>, vector<16x32xf32> -> vector<16x32xf32>
    %c1 = arith.constant 1 : index
    %c0_15 = arith.constant 0 : index
    %14 = vector.load %arg2[%c1, %c0_15] : memref<16x32xf32, #tpu.memory_space<vmem>>, vector<1x32xf32>
    %15 = vector.broadcast %14 : vector<1x32xf32> to vector<16x32xf32>
    %16 = arith.addf %13, %15 : vector<16x32xf32>
    %c64_16 = arith.constant 64 : index
    %c0_17 = arith.constant 0 : index
    %17 = vector.load %arg1[%c64_16, %c0_17] : memref<256x32xf32, #tpu.memory_space<vmem>>, vector<32x32xf32>
    %cst_18 = arith.constant dense<0.000000e+00> : vector<16x32xf32>
    %18 = tpu.matmul %0, %17, %cst_18 {dimension_numbers = #tpu.dot_dimension_numbers<[1], [0], [0], [1], [0, 0, 1, 1], [], []>} : vector<16x32xf32>, vector<32x32xf32>, vector<16x32xf32> -> vector<16x32xf32>
    %c2 = arith.constant 2 : index
    %c0_19 = arith.constant 0 : index
    %19 = vector.load %arg2[%c2, %c0_19] : memref<16x32xf32, #tpu.memory_space<vmem>>, vector<1x32xf32>
    %20 = vector.broadcast %19 : vector<1x32xf32> to vector<16x32xf32>
    %21 = arith.addf %18, %20 : vector<16x32xf32>
    %c0_20 = arith.constant 0 : index
    %c0_21 = arith.constant 0 : index
    %22 = vector.load %arg4[%c0_20, %c0_21] : memref<16x64xf32, #tpu.memory_space<vmem>>, vector<16x64xf32>
    %c96 = arith.constant 96 : index
    %c0_22 = arith.constant 0 : index
    %23 = vector.load %arg1[%c96, %c0_22] : memref<256x32xf32, #tpu.memory_space<vmem>>, vector<32x32xf32>
    %c3 = arith.constant 3 : index
    %c0_23 = arith.constant 0 : index
    %24 = vector.load %arg2[%c3, %c0_23] : memref<16x32xf32, #tpu.memory_space<vmem>>, vector<1x32xf32>
    %25 = tpu.concatenate %16, %16, %16, %16 in 0 : vector<16x32xf32>, vector<16x32xf32>, vector<16x32xf32>, vector<16x32xf32> -> vector<64x32xf32>
    %26 = arith.mulf %25, %4 : vector<64x32xf32>
    %27 = tpu.concatenate %21, %21, %21, %21 in 0 : vector<16x32xf32>, vector<16x32xf32>, vector<16x32xf32>, vector<16x32xf32> -> vector<64x32xf32>
    %28 = arith.mulf %27, %4 : vector<64x32xf32>
    %cst_24 = arith.constant dense<0.000000e+00> : vector<16x64xf32>
    %29 = tpu.matmul %11, %26, %cst_24 {dimension_numbers = #tpu.dot_dimension_numbers<[1], [1], [0], [0], [0, 0, 1, 0], [], []>} : vector<16x32xf32>, vector<64x32xf32>, vector<16x64xf32> -> vector<16x64xf32>
    %cst_25 = arith.constant 0.353553385 : f32
    %30 = vector.broadcast %cst_25 : f32 to vector<16x64xf32>
    %31 = arith.mulf %29, %30 : vector<16x64xf32>
    %32 = arith.addf %31, %22 : vector<16x64xf32>
    %cst_26 = arith.constant dense<0xFF800000> : vector<16xf32>
    %33 = vector.multi_reduction <maximumf>, %32, %cst_26 [1] : vector<16x64xf32> to vector<16xf32>
    %34 = vector.shape_cast %33 : vector<16xf32> to vector<16x1xf32>
    %35 = vector.broadcast %34 : vector<16x1xf32> to vector<16x64xf32>
    %36 = arith.subf %32, %35 : vector<16x64xf32>
    %37 = math.exp %36 : vector<16x64xf32>
    %cst_27 = arith.constant dense<0.000000e+00> : vector<16x32xf32>
    %38 = tpu.matmul %37, %28, %cst_27 {dimension_numbers = #tpu.dot_dimension_numbers<[1], [0], [0], [1], [0, 0, 1, 1], [], []>} : vector<16x64xf32>, vector<64x32xf32>, vector<16x32xf32> -> vector<16x32xf32>
    %cst_28 = arith.constant dense<0.000000e+00> : vector<16x32xf32>
    %39 = tpu.matmul %37, %4, %cst_28 {dimension_numbers = #tpu.dot_dimension_numbers<[1], [0], [0], [1], [0, 0, 1, 1], [], []>} : vector<16x64xf32>, vector<64x32xf32>, vector<16x32xf32> -> vector<16x32xf32>
    %40 = tpu.reciprocal %39 {approx = true} : vector<16x32xf32> -> vector<16x32xf32>
    %41 = arith.mulf %38, %40 : vector<16x32xf32>
    %cst_29 = arith.constant dense<0.000000e+00> : vector<16x32xf32>
    %42 = tpu.matmul %41, %23, %cst_29 {dimension_numbers = #tpu.dot_dimension_numbers<[1], [0], [0], [1], [0, 0, 1, 1], [], []>} : vector<16x32xf32>, vector<32x32xf32>, vector<16x32xf32> -> vector<16x32xf32>
    %43 = vector.broadcast %24 : vector<1x32xf32> to vector<16x32xf32>
    %44 = arith.addf %42, %43 : vector<16x32xf32>
    %45 = arith.addf %0, %44 : vector<16x32xf32>
    %c9 = arith.constant 9 : index
    %c0_30 = arith.constant 0 : index
    %46 = vector.load %arg2[%c9, %c0_30] : memref<16x32xf32, #tpu.memory_space<vmem>>, vector<1x32xf32>
    %c10 = arith.constant 10 : index
    %c0_31 = arith.constant 0 : index
    %47 = vector.load %arg2[%c10, %c0_31] : memref<16x32xf32, #tpu.memory_space<vmem>>, vector<1x32xf32>
    %cst_32 = arith.constant dense<0.000000e+00> : vector<16xf32>
    %48 = vector.multi_reduction <add>, %45, %cst_32 [1] : vector<16x32xf32> to vector<16xf32>
    %49 = vector.shape_cast %48 : vector<16xf32> to vector<16x1xf32>
    %cst_33 = arith.constant 3.200000e+01 : f32
    %50 = vector.broadcast %cst_33 : f32 to vector<16x1xf32>
    %51 = arith.divf %49, %50 : vector<16x1xf32>
    %52 = vector.broadcast %51 : vector<16x1xf32> to vector<16x32xf32>
    %53 = arith.subf %45, %52 : vector<16x32xf32>
    %54 = arith.mulf %53, %53 : vector<16x32xf32>
    %cst_34 = arith.constant dense<0.000000e+00> : vector<16xf32>
    %55 = vector.multi_reduction <add>, %54, %cst_34 [1] : vector<16x32xf32> to vector<16xf32>
    %56 = vector.shape_cast %55 : vector<16xf32> to vector<16x1xf32>
    %cst_35 = arith.constant 3.200000e+01 : f32
    %57 = vector.broadcast %cst_35 : f32 to vector<16x1xf32>
    %58 = arith.divf %56, %57 : vector<16x1xf32>
    %59 = vector.broadcast %51 : vector<16x1xf32> to vector<16x32xf32>
    %60 = arith.subf %45, %59 : vector<16x32xf32>
    %cst_36 = arith.constant 9.99999974E-6 : f32
    %61 = vector.broadcast %cst_36 : f32 to vector<16x1xf32>
    %62 = arith.addf %58, %61 : vector<16x1xf32>
    %63 = math.rsqrt %62 : vector<16x1xf32>
    %64 = vector.broadcast %63 : vector<16x1xf32> to vector<16x32xf32>
    %65 = arith.mulf %60, %64 : vector<16x32xf32>
    %66 = vector.broadcast %46 : vector<1x32xf32> to vector<16x32xf32>
    %67 = arith.mulf %65, %66 : vector<16x32xf32>
    %68 = vector.broadcast %47 : vector<1x32xf32> to vector<16x32xf32>
    %69 = arith.addf %67, %68 : vector<16x32xf32>
    %70 = arith.addf %69, %1 : vector<16x32xf32>
    %c128 = arith.constant 128 : index
    %c0_37 = arith.constant 0 : index
    %71 = vector.load %arg1[%c128, %c0_37] : memref<256x32xf32, #tpu.memory_space<vmem>>, vector<32x32xf32>
    %cst_38 = arith.constant dense<0.000000e+00> : vector<16x32xf32>
    %72 = tpu.matmul %70, %71, %cst_38 {dimension_numbers = #tpu.dot_dimension_numbers<[1], [0], [0], [1], [0, 0, 1, 1], [], []>} : vector<16x32xf32>, vector<32x32xf32>, vector<16x32xf32> -> vector<16x32xf32>
    %c4 = arith.constant 4 : index
    %c0_39 = arith.constant 0 : index
    %73 = vector.load %arg2[%c4, %c0_39] : memref<16x32xf32, #tpu.memory_space<vmem>>, vector<1x32xf32>
    %74 = vector.broadcast %73 : vector<1x32xf32> to vector<16x32xf32>
    %75 = arith.addf %72, %74 : vector<16x32xf32>
    %76 = arith.addf %2, %3 : vector<32x32xf32>
    %c160 = arith.constant 160 : index
    %c0_40 = arith.constant 0 : index
    %77 = vector.load %arg1[%c160, %c0_40] : memref<256x32xf32, #tpu.memory_space<vmem>>, vector<32x32xf32>
    %cst_41 = arith.constant dense<0.000000e+00> : vector<32x32xf32>
    %78 = tpu.matmul %76, %77, %cst_41 {dimension_numbers = #tpu.dot_dimension_numbers<[1], [0], [0], [1], [0, 0, 1, 1], [], []>} : vector<32x32xf32>, vector<32x32xf32>, vector<32x32xf32> -> vector<32x32xf32>
    %c5 = arith.constant 5 : index
    %c0_42 = arith.constant 0 : index
    %79 = vector.load %arg2[%c5, %c0_42] : memref<16x32xf32, #tpu.memory_space<vmem>>, vector<1x32xf32>
    %80 = vector.broadcast %79 : vector<1x32xf32> to vector<32x32xf32>
    %81 = arith.addf %78, %80 : vector<32x32xf32>
    %c192 = arith.constant 192 : index
    %c0_43 = arith.constant 0 : index
    %82 = vector.load %arg1[%c192, %c0_43] : memref<256x32xf32, #tpu.memory_space<vmem>>, vector<32x32xf32>
    %cst_44 = arith.constant dense<0.000000e+00> : vector<32x32xf32>
    %83 = tpu.matmul %2, %82, %cst_44 {dimension_numbers = #tpu.dot_dimension_numbers<[1], [0], [0], [1], [0, 0, 1, 1], [], []>} : vector<32x32xf32>, vector<32x32xf32>, vector<32x32xf32> -> vector<32x32xf32>
    %c6 = arith.constant 6 : index
    %c0_45 = arith.constant 0 : index
    %84 = vector.load %arg2[%c6, %c0_45] : memref<16x32xf32, #tpu.memory_space<vmem>>, vector<1x32xf32>
    %85 = vector.broadcast %84 : vector<1x32xf32> to vector<32x32xf32>
    %86 = arith.addf %83, %85 : vector<32x32xf32>
    %c0_46 = arith.constant 0 : index
    %c0_47 = arith.constant 0 : index
    %87 = vector.load %arg5[%c0_46, %c0_47] : memref<16x128xf32, #tpu.memory_space<vmem>>, vector<16x128xf32>
    %c224 = arith.constant 224 : index
    %c0_48 = arith.constant 0 : index
    %88 = vector.load %arg1[%c224, %c0_48] : memref<256x32xf32, #tpu.memory_space<vmem>>, vector<32x32xf32>
    %c7 = arith.constant 7 : index
    %c0_49 = arith.constant 0 : index
    %89 = vector.load %arg2[%c7, %c0_49] : memref<16x32xf32, #tpu.memory_space<vmem>>, vector<1x32xf32>
    %90 = tpu.concatenate %81, %81, %81, %81 in 0 : vector<32x32xf32>, vector<32x32xf32>, vector<32x32xf32>, vector<32x32xf32> -> vector<128x32xf32>
    %91 = arith.mulf %90, %5 : vector<128x32xf32>
    %92 = tpu.concatenate %86, %86, %86, %86 in 0 : vector<32x32xf32>, vector<32x32xf32>, vector<32x32xf32>, vector<32x32xf32> -> vector<128x32xf32>
    %93 = arith.mulf %92, %5 : vector<128x32xf32>
    %cst_50 = arith.constant dense<0.000000e+00> : vector<16x128xf32>
    %94 = tpu.matmul %75, %91, %cst_50 {dimension_numbers = #tpu.dot_dimension_numbers<[1], [1], [0], [0], [0, 0, 1, 0], [], []>} : vector<16x32xf32>, vector<128x32xf32>, vector<16x128xf32> -> vector<16x128xf32>
    %cst_51 = arith.constant 0.353553385 : f32
    %95 = vector.broadcast %cst_51 : f32 to vector<16x128xf32>
    %96 = arith.mulf %94, %95 : vector<16x128xf32>
    %97 = arith.addf %96, %87 : vector<16x128xf32>
    %cst_52 = arith.constant dense<0xFF800000> : vector<16xf32>
    %98 = vector.multi_reduction <maximumf>, %97, %cst_52 [1] : vector<16x128xf32> to vector<16xf32>
    %99 = vector.shape_cast %98 : vector<16xf32> to vector<16x1xf32>
    %100 = vector.broadcast %99 : vector<16x1xf32> to vector<16x128xf32>
    %101 = arith.subf %97, %100 : vector<16x128xf32>
    %102 = math.exp %101 : vector<16x128xf32>
    %cst_53 = arith.constant dense<0.000000e+00> : vector<16x32xf32>
    %103 = tpu.matmul %102, %93, %cst_53 {dimension_numbers = #tpu.dot_dimension_numbers<[1], [0], [0], [1], [0, 0, 1, 1], [], []>} : vector<16x128xf32>, vector<128x32xf32>, vector<16x32xf32> -> vector<16x32xf32>
    %cst_54 = arith.constant dense<0.000000e+00> : vector<16x32xf32>
    %104 = tpu.matmul %102, %5, %cst_54 {dimension_numbers = #tpu.dot_dimension_numbers<[1], [0], [0], [1], [0, 0, 1, 1], [], []>} : vector<16x128xf32>, vector<128x32xf32>, vector<16x32xf32> -> vector<16x32xf32>
    %105 = tpu.reciprocal %104 {approx = true} : vector<16x32xf32> -> vector<16x32xf32>
    %106 = arith.mulf %103, %105 : vector<16x32xf32>
    %cst_55 = arith.constant dense<0.000000e+00> : vector<16x32xf32>
    %107 = tpu.matmul %106, %88, %cst_55 {dimension_numbers = #tpu.dot_dimension_numbers<[1], [0], [0], [1], [0, 0, 1, 1], [], []>} : vector<16x32xf32>, vector<32x32xf32>, vector<16x32xf32> -> vector<16x32xf32>
    %108 = vector.broadcast %89 : vector<1x32xf32> to vector<16x32xf32>
    %109 = arith.addf %107, %108 : vector<16x32xf32>
    %110 = arith.addf %69, %109 : vector<16x32xf32>
    %c11 = arith.constant 11 : index
    %c0_56 = arith.constant 0 : index
    %111 = vector.load %arg2[%c11, %c0_56] : memref<16x32xf32, #tpu.memory_space<vmem>>, vector<1x32xf32>
    %c12 = arith.constant 12 : index
    %c0_57 = arith.constant 0 : index
    %112 = vector.load %arg2[%c12, %c0_57] : memref<16x32xf32, #tpu.memory_space<vmem>>, vector<1x32xf32>
    %cst_58 = arith.constant dense<0.000000e+00> : vector<16xf32>
    %113 = vector.multi_reduction <add>, %110, %cst_58 [1] : vector<16x32xf32> to vector<16xf32>
    %114 = vector.shape_cast %113 : vector<16xf32> to vector<16x1xf32>
    %cst_59 = arith.constant 3.200000e+01 : f32
    %115 = vector.broadcast %cst_59 : f32 to vector<16x1xf32>
    %116 = arith.divf %114, %115 : vector<16x1xf32>
    %117 = vector.broadcast %116 : vector<16x1xf32> to vector<16x32xf32>
    %118 = arith.subf %110, %117 : vector<16x32xf32>
    %119 = arith.mulf %118, %118 : vector<16x32xf32>
    %cst_60 = arith.constant dense<0.000000e+00> : vector<16xf32>
    %120 = vector.multi_reduction <add>, %119, %cst_60 [1] : vector<16x32xf32> to vector<16xf32>
    %121 = vector.shape_cast %120 : vector<16xf32> to vector<16x1xf32>
    %cst_61 = arith.constant 3.200000e+01 : f32
    %122 = vector.broadcast %cst_61 : f32 to vector<16x1xf32>
    %123 = arith.divf %121, %122 : vector<16x1xf32>
    %124 = vector.broadcast %116 : vector<16x1xf32> to vector<16x32xf32>
    %125 = arith.subf %110, %124 : vector<16x32xf32>
    %cst_62 = arith.constant 9.99999974E-6 : f32
    %126 = vector.broadcast %cst_62 : f32 to vector<16x1xf32>
    %127 = arith.addf %123, %126 : vector<16x1xf32>
    %128 = math.rsqrt %127 : vector<16x1xf32>
    %129 = vector.broadcast %128 : vector<16x1xf32> to vector<16x32xf32>
    %130 = arith.mulf %125, %129 : vector<16x32xf32>
    %131 = vector.broadcast %111 : vector<1x32xf32> to vector<16x32xf32>
    %132 = arith.mulf %130, %131 : vector<16x32xf32>
    %133 = vector.broadcast %112 : vector<1x32xf32> to vector<16x32xf32>
    %134 = arith.addf %132, %133 : vector<16x32xf32>
    %c0_63 = arith.constant 0 : index
    %c0_64 = arith.constant 0 : index
    %135 = vector.load %arg6[%c0_63, %c0_64] : memref<32x2048xf32, #tpu.memory_space<vmem>>, vector<32x2048xf32>
    %cst_65 = arith.constant dense<0.000000e+00> : vector<16x2048xf32>
    %136 = tpu.matmul %134, %135, %cst_65 {dimension_numbers = #tpu.dot_dimension_numbers<[1], [0], [0], [1], [0, 0, 1, 1], [], []>} : vector<16x32xf32>, vector<32x2048xf32>, vector<16x2048xf32> -> vector<16x2048xf32>
    %c0_66 = arith.constant 0 : index
    %c0_67 = arith.constant 0 : index
    %137 = vector.load %arg7[%c0_66, %c0_67] : memref<1x2048xf32, #tpu.memory_space<vmem>>, vector<1x2048xf32>
    %138 = vector.broadcast %137 : vector<1x2048xf32> to vector<16x2048xf32>
    %139 = arith.addf %136, %138 : vector<16x2048xf32>
    %cst_68 = arith.constant 0.000000e+00 : f32
    %140 = vector.broadcast %cst_68 : f32 to vector<16x2048xf32>
    %141 = arith.maximumf %139, %140 : vector<16x2048xf32>
    %c0_69 = arith.constant 0 : index
    %c0_70 = arith.constant 0 : index
    %142 = vector.load %arg8[%c0_69, %c0_70] : memref<2048x32xf32, #tpu.memory_space<vmem>>, vector<2048x32xf32>
    %cst_71 = arith.constant dense<0.000000e+00> : vector<16x32xf32>
    %143 = tpu.matmul %141, %142, %cst_71 {dimension_numbers = #tpu.dot_dimension_numbers<[1], [0], [0], [1], [0, 0, 1, 1], [], []>} : vector<16x2048xf32>, vector<2048x32xf32>, vector<16x32xf32> -> vector<16x32xf32>
    %c8 = arith.constant 8 : index
    %c0_72 = arith.constant 0 : index
    %144 = vector.load %arg2[%c8, %c0_72] : memref<16x32xf32, #tpu.memory_space<vmem>>, vector<1x32xf32>
    %145 = vector.broadcast %144 : vector<1x32xf32> to vector<16x32xf32>
    %146 = arith.addf %143, %145 : vector<16x32xf32>
    %147 = arith.addf %134, %146 : vector<16x32xf32>
    %c13 = arith.constant 13 : index
    %c0_73 = arith.constant 0 : index
    %148 = vector.load %arg2[%c13, %c0_73] : memref<16x32xf32, #tpu.memory_space<vmem>>, vector<1x32xf32>
    %c14 = arith.constant 14 : index
    %c0_74 = arith.constant 0 : index
    %149 = vector.load %arg2[%c14, %c0_74] : memref<16x32xf32, #tpu.memory_space<vmem>>, vector<1x32xf32>
    %cst_75 = arith.constant dense<0.000000e+00> : vector<16xf32>
    %150 = vector.multi_reduction <add>, %147, %cst_75 [1] : vector<16x32xf32> to vector<16xf32>
    %151 = vector.shape_cast %150 : vector<16xf32> to vector<16x1xf32>
    %cst_76 = arith.constant 3.200000e+01 : f32
    %152 = vector.broadcast %cst_76 : f32 to vector<16x1xf32>
    %153 = arith.divf %151, %152 : vector<16x1xf32>
    %154 = vector.broadcast %153 : vector<16x1xf32> to vector<16x32xf32>
    %155 = arith.subf %147, %154 : vector<16x32xf32>
    %156 = arith.mulf %155, %155 : vector<16x32xf32>
    %cst_77 = arith.constant dense<0.000000e+00> : vector<16xf32>
    %157 = vector.multi_reduction <add>, %156, %cst_77 [1] : vector<16x32xf32> to vector<16xf32>
    %158 = vector.shape_cast %157 : vector<16xf32> to vector<16x1xf32>
    %cst_78 = arith.constant 3.200000e+01 : f32
    %159 = vector.broadcast %cst_78 : f32 to vector<16x1xf32>
    %160 = arith.divf %158, %159 : vector<16x1xf32>
    %161 = vector.broadcast %153 : vector<16x1xf32> to vector<16x32xf32>
    %162 = arith.subf %147, %161 : vector<16x32xf32>
    %cst_79 = arith.constant 9.99999974E-6 : f32
    %163 = vector.broadcast %cst_79 : f32 to vector<16x1xf32>
    %164 = arith.addf %160, %163 : vector<16x1xf32>
    %165 = math.rsqrt %164 : vector<16x1xf32>
    %166 = vector.broadcast %165 : vector<16x1xf32> to vector<16x32xf32>
    %167 = arith.mulf %162, %166 : vector<16x32xf32>
    %168 = vector.broadcast %148 : vector<1x32xf32> to vector<16x32xf32>
    %169 = arith.mulf %167, %168 : vector<16x32xf32>
    %170 = vector.broadcast %149 : vector<1x32xf32> to vector<16x32xf32>
    %171 = arith.addf %169, %170 : vector<16x32xf32>
    %c0_80 = arith.constant 0 : index
    %c0_81 = arith.constant 0 : index
    %172 = vector.load %arg9[%c0_80, %c0_81] : memref<16x32xf32, #tpu.memory_space<vmem>>, vector<16x32xf32>
    tpu.vector_store %arg9[%c0_80, %c0_81], %171 {strides = array<i32>} : memref<16x32xf32, #tpu.memory_space<vmem>>, vector<16x32xf32>,
    return
  }
}

</mosaic_0001>

<llo_original>
// kernel: tile.14
$region0: #{tile.14}
  %s0 = inlined_call_operand.vmem [shape: f32[16,4,16], index: 0, kind: input, shape index: {}]
  %s1 = inlined_call_operand.vmem [shape: f32[16,64], index: 1, kind: output, shape index: {}]
  $region1: #{tile.14} parent=0
    #allocation0 [shape = 'u8[65536]{0}', space=vmem, size = 0x10000, scoped, tag = 'scoped mem for input reshape']
    %s3 = ssub.s32 16, 1
    %s4 = scalar_lea.vmem %s0, 60
    %v5 = vld [vmem:[%s4] sm:%s3]
    %s6 = scalar_lea.vmem [#allocation0], 120
    %7 = vst [vmem:[%s6] sm:%s3] %v5
    %s8 = scalar_lea.vmem %s0, 56
    %v9 = vld [vmem:[%s8] sm:%s3]
    %s10 = scalar_lea.vmem [#allocation0], 112
    %11 = vst [vmem:[%s10] sm:%s3] %v9
    %s12 = scalar_lea.vmem %s0, 52
    %v13 = vld [vmem:[%s12] sm:%s3]
    %s14 = scalar_lea.vmem [#allocation0], 104
    %15 = vst [vmem:[%s14] sm:%s3] %v13
    %s16 = scalar_lea.vmem %s0, 48
    %v17 = vld [vmem:[%s16] sm:%s3]
    %s18 = scalar_lea.vmem [#allocation0], 96
    %19 = vst [vmem:[%s18] sm:%s3] %v17
    %s20 = scalar_lea.vmem %s0, 44
    %v21 = vld [vmem:[%s20] sm:%s3]
    %s22 = scalar_lea.vmem [#allocation0], 88
    %23 = vst [vmem:[%s22] sm:%s3] %v21
    %s24 = scalar_lea.vmem %s0, 40
    %v25 = vld [vmem:[%s24] sm:%s3]
    %s26 = scalar_lea.vmem [#allocation0], 80
    %27 = vst [vmem:[%s26] sm:%s3] %v25
    %s28 = scalar_lea.vmem %s0, 36
    %v29 = vld [vmem:[%s28] sm:%s3]
    %s30 = scalar_lea.vmem [#allocation0], 72
    %31 = vst [vmem:[%s30] sm:%s3] %v29
    %s32 = scalar_lea.vmem %s0, 32
    %v33 = vld [vmem:[%s32] sm:%s3]
    %s34 = scalar_lea.vmem [#allocation0], 64
    %35 = vst [vmem:[%s34] sm:%s3] %v33
    %s36 = scalar_lea.vmem %s0, 28
    %v37 = vld [vmem:[%s36] sm:%s3]
    %s38 = scalar_lea.vmem [#allocation0], 56
    %39 = vst [vmem:[%s38] sm:%s3] %v37
    %s40 = scalar_lea.vmem %s0, 24
    %v41 = vld [vmem:[%s40] sm:%s3]
    %s42 = scalar_lea.vmem [#allocation0], 48
    %43 = vst [vmem:[%s42] sm:%s3] %v41
    %s44 = scalar_lea.vmem %s0, 20
    %v45 = vld [vmem:[%s44] sm:%s3]
    %s46 = scalar_lea.vmem [#allocation0], 40
    %47 = vst [vmem:[%s46] sm:%s3] %v45
    %s48 = scalar_lea.vmem %s0, 16
    %v49 = vld [vmem:[%s48] sm:%s3]
    %s50 = scalar_lea.vmem [#allocation0], 32
    %51 = vst [vmem:[%s50] sm:%s3] %v49
    %s52 = scalar_lea.vmem %s0, 12
    %v53 = vld [vmem:[%s52] sm:%s3]
    %s54 = scalar_lea.vmem [#allocation0], 24
    %55 = vst [vmem:[%s54] sm:%s3] %v53
    %s56 = scalar_lea.vmem %s0, 8
    %v57 = vld [vmem:[%s56] sm:%s3]
    %s58 = scalar_lea.vmem [#allocation0], 16
    %59 = vst [vmem:[%s58] sm:%s3] %v57
    %s60 = scalar_lea.vmem %s0, 4
    %v61 = vld [vmem:[%s60] sm:%s3]
    %s62 = scalar_lea.vmem [#allocation0], 8
    %63 = vst [vmem:[%s62] sm:%s3] %v61
    %v64 = vld [vmem:[%s0] sm:%s3]
    %65 = vst [vmem:[#allocation0] sm:%s3] %v64
    %v66 = vld [vmem:[#allocation0] ss:$8 sm:$0xf]
    %v67 = vld [vmem:[#allocation0] ss:$8 sm:$0xf0]
    %vm68 = vcmask 1047556
    %v69 = vsel %vm68, %v67, %v66
    %vm70 = vcmask 130048
    %71 = vst.msk [vmem:[%s1] sm:$0xff] %vm70, %v69
    %s72 = scalar_lea.vmem [#allocation0], 64
    %v73 = vld [vmem:[%s72] ss:$8 sm:$0xf]
    %s74 = scalar_lea.vmem [#allocation0], 64
    %v75 = vld [vmem:[%s74] ss:$8 sm:$0xf0]
    %vm76 = vcmask 1047556
    %v77 = vsel %vm76, %v75, %v73
    %vm78 = vcmask 130048
    %s79 = scalar_lea.vmem %s1, 8
    %80 = vst.msk [vmem:[%s79] sm:$0xff] %vm78, %v77
    %s81 = scalar_lea.vmem [#allocation0], 3
    %v82 = vld [vmem:[%s81] ss:$8 sm:$0xf]
    %s83 = scalar_lea.vmem [#allocation0], 3
    %v84 = vld [vmem:[%s83] ss:$8 sm:$0xf0]
    %vm85 = vcmask 1047556
    %v86 = vsel %vm85, %v84, %v82
    %87 = vrot.lane.b32.xlu0 %v86, 48
    %v88 = vpop.permute.xlu0 %87
    %vm89 = vcmask 523648
    %90 = vst.msk [vmem:[%s1] sm:$0xff] %vm89, %v88
    %s91 = scalar_lea.vmem [#allocation0], 67
    %v92 = vld [vmem:[%s91] ss:$8 sm:$0xf]
    %s93 = scalar_lea.vmem [#allocation0], 67
    %v94 = vld [vmem:[%s93] ss:$8 sm:$0xf0]
    %vm95 = vcmask 1047556
    %v96 = vsel %vm95, %v94, %v92
    %97 = vrot.lane.b32.xlu0 %v96, 48
    %v98 = vpop.permute.xlu0 %97
    %vm99 = vcmask 523648
    %s100 = scalar_lea.vmem %s1, 8
    %101 = vst.msk [vmem:[%s100] sm:$0xff] %vm99, %v98
    %s102 = scalar_lea.vmem [#allocation0], 2
    %v103 = vld [vmem:[%s102] ss:$8 sm:$0xf]
    %s104 = scalar_lea.vmem [#allocation0], 2
    %v105 = vld [vmem:[%s104] ss:$8 sm:$0xf0]
    %vm106 = vcmask 1047556
    %v107 = vsel %vm106, %v105, %v103
    %108 = vrot.lane.b32.xlu0 %v107, 32
    %v109 = vpop.permute.xlu0 %108
    %vm110 = vcmask 392448
    %111 = vst.msk [vmem:[%s1] sm:$0xff] %vm110, %v109
    %s112 = scalar_lea.vmem [#allocation0], 66
    %v113 = vld [vmem:[%s112] ss:$8 sm:$0xf]
    %s114 = scalar_lea.vmem [#allocation0], 66
    %v115 = vld [vmem:[%s114] ss:$8 sm:$0xf0]
    %vm116 = vcmask 1047556
    %v117 = vsel %vm116, %v115, %v113
    %118 = vrot.lane.b32.xlu0 %v117, 32
    %v119 = vpop.permute.xlu0 %118
    %vm120 = vcmask 392448
    %s121 = scalar_lea.vmem %s1, 8
    %122 = vst.msk [vmem:[%s121] sm:$0xff] %vm120, %v119
    %s123 = scalar_lea.vmem [#allocation0], 1
    %v124 = vld [vmem:[%s123] ss:$8 sm:$0xf]
    %s125 = scalar_lea.vmem [#allocation0], 1
    %v126 = vld [vmem:[%s125] ss:$8 sm:$0xf0]
    %vm127 = vcmask 1047556
    %v128 = vsel %vm127, %v126, %v124
    %129 = vrot.lane.b32.xlu0 %v128, 16
    %v130 = vpop.permute.xlu0 %129
    %vm131 = vcmask 261248
    %132 = vst.msk [vmem:[%s1] sm:$0xff] %vm131, %v130
    %s133 = scalar_lea.vmem [#allocation0], 65
    %v134 = vld [vmem:[%s133] ss:$8 sm:$0xf]
    %s135 = scalar_lea.vmem [#allocation0], 65
    %v136 = vld [vmem:[%s135] ss:$8 sm:$0xf0]
    %vm137 = vcmask 1047556
    %v138 = vsel %vm137, %v136, %v134
    %139 = vrot.lane.b32.xlu0 %v138, 16
    %v140 = vpop.permute.xlu0 %139
    %vm141 = vcmask 261248
    %s142 = scalar_lea.vmem %s1, 8
    %143 = vst.msk [vmem:[%s142] sm:$0xff] %vm141, %v140

// kernel: tile.19
$region0: #{tile.19}
  %s0 = inlined_call_operand.vmem [shape: f32[16,4,32], index: 0, kind: input, shape index: {}]
  %s1 = inlined_call_operand.vmem [shape: f32[16,128], index: 1, kind: output, shape index: {}]
  $region1: #{tile.19} parent=0
    #allocation0 [shape = 'u8[65536]{0}', space=vmem, size = 0x10000, scoped, tag = 'scoped mem for input reshape']
    %s3 = ssub.s32 16, 1
    %s4 = scalar_lea.vmem %s0, 60
    %v5 = vld [vmem:[%s4] sm:%s3]
    %s6 = scalar_lea.vmem [#allocation0], 120
    %7 = vst [vmem:[%s6] sm:%s3] %v5
    %s8 = scalar_lea.vmem %s0, 56
    %v9 = vld [vmem:[%s8] sm:%s3]
    %s10 = scalar_lea.vmem [#allocation0], 112
    %11 = vst [vmem:[%s10] sm:%s3] %v9
    %s12 = scalar_lea.vmem %s0, 52
    %v13 = vld [vmem:[%s12] sm:%s3]
    %s14 = scalar_lea.vmem [#allocation0], 104
    %15 = vst [vmem:[%s14] sm:%s3] %v13
    %s16 = scalar_lea.vmem %s0, 48
    %v17 = vld [vmem:[%s16] sm:%s3]
    %s18 = scalar_lea.vmem [#allocation0], 96
    %19 = vst [vmem:[%s18] sm:%s3] %v17
    %s20 = scalar_lea.vmem %s0, 44
    %v21 = vld [vmem:[%s20] sm:%s3]
    %s22 = scalar_lea.vmem [#allocation0], 88
    %23 = vst [vmem:[%s22] sm:%s3] %v21
    %s24 = scalar_lea.vmem %s0, 40
    %v25 = vld [vmem:[%s24] sm:%s3]
    %s26 = scalar_lea.vmem [#allocation0], 80
    %27 = vst [vmem:[%s26] sm:%s3] %v25
    %s28 = scalar_lea.vmem %s0, 36
    %v29 = vld [vmem:[%s28] sm:%s3]
    %s30 = scalar_lea.vmem [#allocation0], 72
    %31 = vst [vmem:[%s30] sm:%s3] %v29
    %s32 = scalar_lea.vmem %s0, 32
    %v33 = vld [vmem:[%s32] sm:%s3]
    %s34 = scalar_lea.vmem [#allocation0], 64
    %35 = vst [vmem:[%s34] sm:%s3] %v33
    %s36 = scalar_lea.vmem %s0, 28
    %v37 = vld [vmem:[%s36] sm:%s3]
    %s38 = scalar_lea.vmem [#allocation0], 56
    %39 = vst [vmem:[%s38] sm:%s3] %v37
    %s40 = scalar_lea.vmem %s0, 24
    %v41 = vld [vmem:[%s40] sm:%s3]
    %s42 = scalar_lea.vmem [#allocation0], 48
    %43 = vst [vmem:[%s42] sm:%s3] %v41
    %s44 = scalar_lea.vmem %s0, 20
    %v45 = vld [vmem:[%s44] sm:%s3]
    %s46 = scalar_lea.vmem [#allocation0], 40
    %47 = vst [vmem:[%s46] sm:%s3] %v45
    %s48 = scalar_lea.vmem %s0, 16
    %v49 = vld [vmem:[%s48] sm:%s3]
    %s50 = scalar_lea.vmem [#allocation0], 32
    %51 = vst [vmem:[%s50] sm:%s3] %v49
    %s52 = scalar_lea.vmem %s0, 12
    %v53 = vld [vmem:[%s52] sm:%s3]
    %s54 = scalar_lea.vmem [#allocation0], 24
    %55 = vst [vmem:[%s54] sm:%s3] %v53
    %s56 = scalar_lea.vmem %s0, 8
    %v57 = vld [vmem:[%s56] sm:%s3]
    %s58 = scalar_lea.vmem [#allocation0], 16
    %59 = vst [vmem:[%s58] sm:%s3] %v57
    %s60 = scalar_lea.vmem %s0, 4
    %v61 = vld [vmem:[%s60] sm:%s3]
    %s62 = scalar_lea.vmem [#allocation0], 8
    %63 = vst [vmem:[%s62] sm:%s3] %v61
    %v64 = vld [vmem:[%s0] sm:%s3]
    %65 = vst [vmem:[#allocation0] sm:%s3] %v64
    %v66 = vld [vmem:[#allocation0] ss:$8 sm:$0xf]
    %v67 = vld [vmem:[#allocation0] ss:$8 sm:$0xf0]
    %vm68 = vcmask 1047556
    %v69 = vsel %vm68, %v67, %v66
    %vm70 = vcmask 261120
    %71 = vst.msk [vmem:[%s1] sm:$0xff] %vm70, %v69
    %s72 = scalar_lea.vmem [#allocation0], 64
    %v73 = vld [vmem:[%s72] ss:$8 sm:$0xf]
    %s74 = scalar_lea.vmem [#allocation0], 64
    %v75 = vld [vmem:[%s74] ss:$8 sm:$0xf0]
    %vm76 = vcmask 1047556
    %v77 = vsel %vm76, %v75, %v73
    %vm78 = vcmask 261120
    %s79 = scalar_lea.vmem %s1, 8
    %80 = vst.msk [vmem:[%s79] sm:$0xff] %vm78, %v77
    %s81 = scalar_lea.vmem [#allocation0], 3
    %v82 = vld [vmem:[%s81] ss:$8 sm:$0xf]
    %s83 = scalar_lea.vmem [#allocation0], 3
    %v84 = vld [vmem:[%s83] ss:$8 sm:$0xf0]
    %vm85 = vcmask 1047556
    %v86 = vsel %vm85, %v84, %v82
    %87 = vrot.lane.b32.xlu0 %v86, 96
    %v88 = vpop.permute.xlu0 %87
    %vm89 = vcmask 1048320
    %90 = vst.msk [vmem:[%s1] sm:$0xff] %vm89, %v88
    %s91 = scalar_lea.vmem [#allocation0], 67
    %v92 = vld [vmem:[%s91] ss:$8 sm:$0xf]
    %s93 = scalar_lea.vmem [#allocation0], 67
    %v94 = vld [vmem:[%s93] ss:$8 sm:$0xf0]
    %vm95 = vcmask 1047556
    %v96 = vsel %vm95, %v94, %v92
    %97 = vrot.lane.b32.xlu0 %v96, 96
    %v98 = vpop.permute.xlu0 %97
    %vm99 = vcmask 1048320
    %s100 = scalar_lea.vmem %s1, 8
    %101 = vst.msk [vmem:[%s100] sm:$0xff] %vm99, %v98
    %s102 = scalar_lea.vmem [#allocation0], 2
    %v103 = vld [vmem:[%s102] ss:$8 sm:$0xf]
    %s104 = scalar_lea.vmem [#allocation0], 2
    %v105 = vld [vmem:[%s104] ss:$8 sm:$0xf0]
    %vm106 = vcmask 1047556
    %v107 = vsel %vm106, %v105, %v103
    %108 = vrot.lane.b32.xlu0 %v107, 64
    %v109 = vpop.permute.xlu0 %108
    %vm110 = vcmask 785920
    %111 = vst.msk [vmem:[%s1] sm:$0xff] %vm110, %v109
    %s112 = scalar_lea.vmem [#allocation0], 66
    %v113 = vld [vmem:[%s112] ss:$8 sm:$0xf]
    %s114 = scalar_lea.vmem [#allocation0], 66
    %v115 = vld [vmem:[%s114] ss:$8 sm:$0xf0]
    %vm116 = vcmask 1047556
    %v117 = vsel %vm116, %v115, %v113
    %118 = vrot.lane.b32.xlu0 %v117, 64
    %v119 = vpop.permute.xlu0 %118
    %vm120 = vcmask 785920
    %s121 = scalar_lea.vmem %s1, 8
    %122 = vst.msk [vmem:[%s121] sm:$0xff] %vm120, %v119
    %s123 = scalar_lea.vmem [#allocation0], 1
    %v124 = vld [vmem:[%s123] ss:$8 sm:$0xf]
    %s125 = scalar_lea.vmem [#allocation0], 1
    %v126 = vld [vmem:[%s125] ss:$8 sm:$0xf0]
    %vm127 = vcmask 1047556
    %v128 = vsel %vm127, %v126, %v124
    %129 = vrot.lane.b32.xlu0 %v128, 32
    %v130 = vpop.permute.xlu0 %129
    %vm131 = vcmask 523520
    %132 = vst.msk [vmem:[%s1] sm:$0xff] %vm131, %v130
    %s133 = scalar_lea.vmem [#allocation0], 65
    %v134 = vld [vmem:[%s133] ss:$8 sm:$0xf]
    %s135 = scalar_lea.vmem [#allocation0], 65
    %v136 = vld [vmem:[%s135] ss:$8 sm:$0xf0]
    %vm137 = vcmask 1047556
    %v138 = vsel %vm137, %v136, %v134
    %139 = vrot.lane.b32.xlu0 %v138, 32
    %v140 = vpop.permute.xlu0 %139
    %vm141 = vcmask 523520
    %s142 = scalar_lea.vmem %s1, 8
    %143 = vst.msk [vmem:[%s142] sm:$0xff] %vm141, %v140

// kernel: fwd.1
$region0: #{fwd.1}
  #allocation0 [shape = 'u32[]', space=smem, size = 0x4, offset = 0x4, fixed_abs, tag = 'smem constant byte address 0x4 - core index']
  #allocation1 [shape = 'u32[72,128]{1,0:T(1,128)}', space=vmem, size = 0x9000, scoped, tag = 'internal scratch']
  %s0 = inlined_call_operand.vmem [shape: f32[96,32], index: 0, kind: input, shape index: {}]
  %s1 = inlined_call_operand.vmem [shape: f32[256,32], index: 1, kind: input, shape index: {}]
  %s2 = inlined_call_operand.vmem [shape: f32[16,32], index: 2, kind: input, shape index: {}]
  %s3 = inlined_call_operand.vmem [shape: f32[192,32], index: 3, kind: input, shape index: {}]
  %s4 = inlined_call_operand.vmem [shape: f32[16,64], index: 4, kind: input, shape index: {}]
  %s5 = inlined_call_operand.vmem [shape: f32[16,128], index: 5, kind: input, shape index: {}]
  %s6 = inlined_call_operand.vmem [shape: f32[32,2048], index: 6, kind: input, shape index: {}]
  %s7 = inlined_call_operand.vmem [shape: f32[1,2048], index: 7, kind: input, shape index: {}]
  %s8 = inlined_call_operand.vmem [shape: f32[2048,32], index: 8, kind: input, shape index: {}]
  %s9 = inlined_call_operand.vmem [shape: f32[16,32], index: 9, kind: output, shape index: {}]
  %s10 = sld [smem:[#allocation0]]
  $region46: #{fwd.1} parent=0
    _
  %s12 = ssub.s32 1, %s10
  %s13 = scalar_select 0, %s12, %s10
  // Predicated region
  $region2: #{fwd.1} parent=0 // pred_check
    _
  $region3: #{fwd.1} parent=0 // pred_check_branch
    %15 = sbr.rel (0) target = $region5
  $region4: #{fwd.1} parent=0 // pred_region
    _
  $region5: #{fwd.1} parent=0 // pred_fallthru
    _
  // Predicated region
  $region6: #{fwd.1} parent=0 // pred_check
    _
  $region7: #{fwd.1} parent=0 // pred_check_branch
    %17 = sbr.rel (0) target = $region9
  $region8: #{fwd.1} parent=0 // pred_region
    _
  $region9: #{fwd.1} parent=0 // pred_fallthru
    _
  // Predicated region
  $region10: #{fwd.1} parent=0 // pred_check
    _
  $region11: #{fwd.1} parent=0 // pred_check_branch
    %19 = sbr.rel (0) target = $region13
  $region12: #{fwd.1} parent=0 // pred_region
    _
  $region13: #{fwd.1} parent=0 // pred_fallthru
    _
  // Predicated region
  $region14: #{fwd.1} parent=0 // pred_check
    _
  $region15: #{fwd.1} parent=0 // pred_check_branch
    %21 = sbr.rel (0) target = $region17
  $region16: #{fwd.1} parent=0 // pred_region
    _
  $region17: #{fwd.1} parent=0 // pred_fallthru
    _
  // Predicated region
  $region18: #{fwd.1} parent=0 // pred_check
    _
  $region19: #{fwd.1} parent=0 // pred_check_branch
    %23 = sbr.rel (0) target = $region21
  $region20: #{fwd.1} parent=0 // pred_region
    _
  $region21: #{fwd.1} parent=0 // pred_fallthru
    _
  // Predicated region
  $region22: #{fwd.1} parent=0 // pred_check
    _
  $region23: #{fwd.1} parent=0 // pred_check_branch
    %25 = sbr.rel (0) target = $region25
  $region24: #{fwd.1} parent=0 // pred_region
    _
  $region25: #{fwd.1} parent=0 // pred_fallthru
    _
  // Predicated region
  $region26: #{fwd.1} parent=0 // pred_check
    _
  $region27: #{fwd.1} parent=0 // pred_check_branch
    %27 = sbr.rel (0) target = $region29
  $region28: #{fwd.1} parent=0 // pred_region
    _
  $region29: #{fwd.1} parent=0 // pred_fallthru
    _
  // Predicated region
  $region30: #{fwd.1} parent=0 // pred_check
    _
  $region31: #{fwd.1} parent=0 // pred_check_branch
    %29 = sbr.rel (0) target = $region33
  $region32: #{fwd.1} parent=0 // pred_region
    _
  $region33: #{fwd.1} parent=0 // pred_fallthru
    _
  // Predicated region
  $region34: #{fwd.1} parent=0 // pred_check
    _
  $region35: #{fwd.1} parent=0 // pred_check_branch
    %31 = sbr.rel (0) target = $region37
  $region36: #{fwd.1} parent=0 // pred_region
    _
  $region37: #{fwd.1} parent=0 // pred_fallthru
    _
  %v32 = vld [vmem:[%s0] sm:$0xff]
  %v33 = vld [vmem:[%s0 + $0x8] sm:$0xff]
  %v34 = vld [vmem:[%s0 + $0x10] sm:$0xff]
  %v35 = vld [vmem:[%s0 + $0x18] sm:$0xff]
  %v36 = vld [vmem:[%s0 + $0x20] sm:$0xff]
  %v37 = vld [vmem:[%s0 + $0x28] sm:$0xff]
  %v38 = vld [vmem:[%s0 + $0x30] sm:$0xff]
  %v39 = vld [vmem:[%s0 + $0x38] sm:$0xff]
  %v40 = vld [vmem:[%s0 + $0x40] sm:$0xff]
  %v41 = vld [vmem:[%s0 + $0x48] sm:$0xff]
  %v42 = vld [vmem:[%s0 + $0x50] sm:$0xff]
  %v43 = vld [vmem:[%s0 + $0x58] sm:$0xff]
  %v44 = vld [vmem:[%s3] sm:$0xff]
  %v45 = vld [vmem:[%s3 + $0x8] sm:$0xff]
  %v46 = vld [vmem:[%s3 + $0x10] sm:$0xff]
  %v47 = vld [vmem:[%s3 + $0x18] sm:$0xff]
  %v48 = vld [vmem:[%s3 + $0x20] sm:$0xff]
  %v49 = vld [vmem:[%s3 + $0x28] sm:$0xff]
  %v50 = vld [vmem:[%s3 + $0x30] sm:$0xff]
  %v51 = vld [vmem:[%s3 + $0x38] sm:$0xff]
  %v52 = vld [vmem:[%s3 + $0x40] sm:$0xff]
  %v53 = vld [vmem:[%s3 + $0x48] sm:$0xff]
  %v54 = vld [vmem:[%s3 + $0x50] sm:$0xff]
  %v55 = vld [vmem:[%s3 + $0x58] sm:$0xff]
  %v56 = vld [vmem:[%s3 + $0x60] sm:$0xff]
  %v57 = vld [vmem:[%s3 + $0x68] sm:$0xff]
  %v58 = vld [vmem:[%s3 + $0x70] sm:$0xff]
  %v59 = vld [vmem:[%s3 + $0x78] sm:$0xff]
  %v60 = vld [vmem:[%s3 + $0x80] sm:$0xff]
  %v61 = vld [vmem:[%s3 + $0x88] sm:$0xff]
  %v62 = vld [vmem:[%s3 + $0x90] sm:$0xff]
  %v63 = vld [vmem:[%s3 + $0x98] sm:$0xff]
  %v64 = vld [vmem:[%s3 + $0xa0] sm:$0xff]
  %v65 = vld [vmem:[%s3 + $0xa8] sm:$0xff]
  %v66 = vld [vmem:[%s3 + $0xb0] sm:$0xff]
  %v67 = vld [vmem:[%s3 + $0xb8] sm:$0xff]
  %v68 = vadd.f32 %v32, %v34
  %v69 = vadd.f32 %v33, %v35
  %v70 = vld [vmem:[%s1] sm:$0xff]
  %v71 = vld [vmem:[%s1 + $0x8] sm:$0xff]
  %v72 = vld [vmem:[%s1 + $0x10] sm:$0xff]
  %v73 = vld [vmem:[%s1 + $0x18] sm:$0xff]
  %v74 = vld [vmem:[%s2] sm:$0x1]
  %v75 = vperm.slane %v74, 0
  %vm76 = vcmask 261120
  %v78 = vsel %vm76, %v68, 0
  %v81 = vsel %vm76, %v69, 0
  %83 = vmatpush.msra.mxu0 0.0
  %84 = vmatpush.msra.mxu0 0.0
  %85 = vmatpush.msra.mxu0 0.0
  %86 = vmatpush.msra.mxu0 0.0
  %87 = vmatpush.msra.mxu0 0.0
  %88 = vmatpush.msra.mxu0 0.0
  %89 = vmatpush.msra.mxu0 0.0
  %90 = vmatpush.msra.mxu0 0.0
  %91 = vmatpush.msra.mxu0 0.0
  %92 = vmatpush.msra.mxu0 0.0
  %93 = vmatpush.msra.mxu0 0.0
  %94 = vmatpush.msra.mxu0 0.0
  %95 = vmatpush.msra.mxu0 %v73
  %96 = vmatpush.msra.mxu0 %v72
  %97 = vmatpush.msra.mxu0 %v71
  %98 = vmatpush.msra.mxu0 %v70
  %99 = vmatmul.f32.gmra.mxu0 %v78
  %v100 = vpop.f32.mrf.mxu0
  %v101 = vadd.f32 %v75, %v100
  %102 = vmatmul.f32.gmra.mxu0 %v81
  %v103 = vpop.f32.mrf.mxu0
  %v104 = vadd.f32 %v75, %v103
  %105 = vdwg.mxu0
  %v106 = vld [vmem:[%s1 + $0x20] sm:$0xff]
  %v107 = vld [vmem:[%s1 + $0x28] sm:$0xff]
  %v108 = vld [vmem:[%s1 + $0x30] sm:$0xff]
  %v109 = vld [vmem:[%s1 + $0x38] sm:$0xff]
  %v110 = vld [vmem:[%s2 + $0x1] sm:$0x1]
  %v111 = vperm.slane %v110, 0
  %112 = vmatpush.msra.mxu0 0.0
  %113 = vmatpush.msra.mxu0 0.0
  %114 = vmatpush.msra.mxu0 0.0
  %115 = vmatpush.msra.mxu0 0.0
  %116 = vmatpush.msra.mxu0 0.0
  %117 = vmatpush.msra.mxu0 0.0
  %118 = vmatpush.msra.mxu0 0.0
  %119 = vmatpush.msra.mxu0 0.0
  %120 = vmatpush.msra.mxu0 0.0
  %121 = vmatpush.msra.mxu0 0.0
  %122 = vmatpush.msra.mxu0 0.0
  %123 = vmatpush.msra.mxu0 0.0
  %124 = vmatpush.msra.mxu0 %v109
  %125 = vmatpush.msra.mxu0 %v108
  %126 = vmatpush.msra.mxu0 %v107
  %127 = vmatpush.msra.mxu0 %v106
  %128 = vmatmul.f32.gmra.mxu0 %v78
  %v129 = vpop.f32.mrf.mxu0
  %v130 = vadd.f32 %v111, %v129
  %131 = vmatmul.f32.gmra.mxu0 %v81
  %v132 = vpop.f32.mrf.mxu0
  %v133 = vadd.f32 %v111, %v132
  %134 = vdwg.mxu0
  %v135 = vld [vmem:[%s1 + $0x40] sm:$0xff]
  %v136 = vld [vmem:[%s1 + $0x48] sm:$0xff]
  %v137 = vld [vmem:[%s1 + $0x50] sm:$0xff]
  %v138 = vld [vmem:[%s1 + $0x58] sm:$0xff]
  %v139 = vld [vmem:[%s2 + $0x2] sm:$0x1]
  %v140 = vperm.slane %v139, 0
  %v142 = vsel %vm76, %v32, 0
  %v145 = vsel %vm76, %v33, 0
  %147 = vmatpush.msra.mxu0 0.0
  %148 = vmatpush.msra.mxu0 0.0
  %149 = vmatpush.msra.mxu0 0.0
  %150 = vmatpush.msra.mxu0 0.0
  %151 = vmatpush.msra.mxu0 0.0
  %152 = vmatpush.msra.mxu0 0.0
  %153 = vmatpush.msra.mxu0 0.0
  %154 = vmatpush.msra.mxu0 0.0
  %155 = vmatpush.msra.mxu0 0.0
  %156 = vmatpush.msra.mxu0 0.0
  %157 = vmatpush.msra.mxu0 0.0
  %158 = vmatpush.msra.mxu0 0.0
  %159 = vmatpush.msra.mxu0 %v138
  %160 = vmatpush.msra.mxu0 %v137
  %161 = vmatpush.msra.mxu0 %v136
  %162 = vmatpush.msra.mxu0 %v135
  %163 = vmatmul.f32.gmra.mxu0 %v142
  %v164 = vpop.f32.mrf.mxu0
  %v165 = vadd.f32 %v140, %v164
  %166 = vmatmul.f32.gmra.mxu0 %v145
  %v167 = vpop.f32.mrf.mxu0
  %v168 = vadd.f32 %v140, %v167
  %169 = vdwg.mxu0
  %v170 = vld [vmem:[%s4] sm:$0xff]
  %v171 = vld [vmem:[%s4 + $0x8] sm:$0xff]
  %v172 = vld [vmem:[%s1 + $0x60] sm:$0xff]
  %v173 = vld [vmem:[%s1 + $0x68] sm:$0xff]
  %v174 = vld [vmem:[%s1 + $0x70] sm:$0xff]
  %v175 = vld [vmem:[%s1 + $0x78] sm:$0xff]
  %v176 = vld [vmem:[%s2 + $0x3] sm:$0x1]
  %v177 = vmul.f32 %v130, %v44
  %v178 = vmul.f32 %v133, %v45
  %v179 = vmul.f32 %v130, %v46
  %v180 = vmul.f32 %v133, %v47
  %v181 = vmul.f32 %v130, %v48
  %v182 = vmul.f32 %v133, %v49
  %v183 = vmul.f32 %v130, %v50
  %v184 = vmul.f32 %v133, %v51
  %v185 = vmul.f32 %v165, %v44
  %v186 = vmul.f32 %v168, %v45
  %v187 = vmul.f32 %v165, %v46
  %v188 = vmul.f32 %v168, %v47
  %v189 = vmul.f32 %v165, %v48
  %v190 = vmul.f32 %v168, %v49
  %v191 = vmul.f32 %v165, %v50
  %v192 = vmul.f32 %v168, %v51
  %v194 = vsel %vm76, %v101, 0
  %v197 = vsel %vm76, %v104, 0
  %v200 = vsel %vm76, %v177, 0
  %v203 = vsel %vm76, %v178, 0
  %v206 = vsel %vm76, %v179, 0
  %v209 = vsel %vm76, %v180, 0
  %v212 = vsel %vm76, %v181, 0
  %v215 = vsel %vm76, %v182, 0
  %v218 = vsel %vm76, %v183, 0
  %v221 = vsel %vm76, %v184, 0
  %223 = vmatpush.xpose.msra.mxu0 0.0
  %224 = vmatpush.xpose.msra.mxu0 0.0
  %225 = vmatpush.xpose.msra.mxu0 0.0
  %226 = vmatpush.xpose.msra.mxu0 0.0
  %227 = vmatpush.xpose.msra.mxu0 0.0
  %228 = vmatpush.xpose.msra.mxu0 0.0
  %229 = vmatpush.xpose.msra.mxu0 0.0
  %230 = vmatpush.xpose.msra.mxu0 0.0
  %231 = vmatpush.xpose.msra.mxu0 %v221
  %232 = vmatpush.xpose.msra.mxu0 %v218
  %233 = vmatpush.xpose.msra.mxu0 %v215
  %234 = vmatpush.xpose.msra.mxu0 %v212
  %235 = vmatpush.xpose.msra.mxu0 %v209
  %236 = vmatpush.xpose.msra.mxu0 %v206
  %237 = vmatpush.xpose.msra.mxu0 %v203
  %238 = vmatpush.xpose.msra.mxu0 %v200
  %239 = vmatmul.f32.gmra.mxu0 %v194
  %v240 = vpop.f32.mrf.mxu0
  %v241 = vadd.f32 0.0, %v240
  %242 = vmatmul.f32.gmra.mxu0 %v197
  %v243 = vpop.f32.mrf.mxu0
  %v244 = vadd.f32 0.0, %v243
  %245 = vdwg.mxu0
  %v246 = vmul.f32 %v241, 0.35355338
  %v247 = vmul.f32 %v244, 0.35355338
  %v248 = vadd.f32 %v246, %v170
  %v249 = vadd.f32 %v247, %v171
  %vm250 = vcmask 523264
  %v251 = vsel %vm250, %v248, -inf
  %252 = vmax.xlane.f32.xlu0 %v251
  %v253 = vpop.xlane.xlu0 %252
  %v254 = vsel %vm250, %v249, -inf
  %255 = vmax.xlane.f32.xlu0 %v254
  %v256 = vpop.xlane.xlu0 %255
  %v257 = vsub.f32 %v248, %v253
  %v258 = vsub.f32 %v249, %v256
  %v259 = vmul.f32 %v257, 1.442695
  %v260 = vpow.pop %v259
  %v261 = vmul.f32 %v258, 1.442695
  %v262 = vpow.pop %v261
  %v264 = vsel %vm250, %v260, 0
  %v267 = vsel %vm250, %v262, 0
  %269 = vmatpush.msra.mxu0 0.0
  %270 = vmatpush.msra.mxu0 0.0
  %271 = vmatpush.msra.mxu0 0.0
  %272 = vmatpush.msra.mxu0 0.0
  %273 = vmatpush.msra.mxu0 0.0
  %274 = vmatpush.msra.mxu0 0.0
  %275 = vmatpush.msra.mxu0 0.0
  %276 = vmatpush.msra.mxu0 0.0
  %277 = vmatpush.msra.mxu0 %v192
  %278 = vmatpush.msra.mxu0 %v191
  %279 = vmatpush.msra.mxu0 %v190
  %280 = vmatpush.msra.mxu0 %v189
  %281 = vmatpush.msra.mxu0 %v188
  %282 = vmatpush.msra.mxu0 %v187
  %283 = vmatpush.msra.mxu0 %v186
  %284 = vmatpush.msra.mxu0 %v185
  %285 = vmatmul.f32.gmra.mxu0 %v264
  %v286 = vpop.f32.mrf.mxu0
  %v287 = vadd.f32 0.0, %v286
  %288 = vmatmul.f32.gmra.mxu0 %v267
  %v289 = vpop.f32.mrf.mxu0
  %v290 = vadd.f32 0.0, %v289
  %291 = vdwg.mxu0
  %292 = vmatpush.msra.mxu0 0.0
  %293 = vmatpush.msra.mxu0 0.0
  %294 = vmatpush.msra.mxu0 0.0
  %295 = vmatpush.msra.mxu0 0.0
  %296 = vmatpush.msra.mxu0 0.0
  %297 = vmatpush.msra.mxu0 0.0
  %298 = vmatpush.msra.mxu0 0.0
  %299 = vmatpush.msra.mxu0 0.0
  %300 = vmatpush.msra.mxu0 %v51
  %301 = vmatpush.msra.mxu0 %v50
  %302 = vmatpush.msra.mxu0 %v49
  %303 = vmatpush.msra.mxu0 %v48
  %304 = vmatpush.msra.mxu0 %v47
  %305 = vmatpush.msra.mxu0 %v46
  %306 = vmatpush.msra.mxu0 %v45
  %307 = vmatpush.msra.mxu0 %v44
  %308 = vmatmul.f32.gmra.mxu0 %v264
  %v309 = vpop.f32.mrf.mxu0
  %v310 = vadd.f32 0.0, %v309
  %311 = vmatmul.f32.gmra.mxu0 %v267
  %v312 = vpop.f32.mrf.mxu0
  %v313 = vadd.f32 0.0, %v312
  %314 = vdwg.mxu0
  %v315 = vrcp.pop %v310
  %v316 = vrcp.pop %v313
  %v317 = vmul.f32 %v287, %v315
  %v318 = vmul.f32 %v290, %v316
  %v319 = vperm.slane %v176, 0
  %v321 = vsel %vm76, %v317, 0
  %v324 = vsel %vm76, %v318, 0
  %326 = vmatpush.msra.mxu0 0.0
  %327 = vmatpush.msra.mxu0 0.0
  %328 = vmatpush.msra.mxu0 0.0
  %329 = vmatpush.msra.mxu0 0.0
  %330 = vmatpush.msra.mxu0 0.0
  %331 = vmatpush.msra.mxu0 0.0
  %332 = vmatpush.msra.mxu0 0.0
  %333 = vmatpush.msra.mxu0 0.0
  %334 = vmatpush.msra.mxu0 0.0
  %335 = vmatpush.msra.mxu0 0.0
  %336 = vmatpush.msra.mxu0 0.0
  %337 = vmatpush.msra.mxu0 0.0
  %338 = vmatpush.msra.mxu0 %v175
  %339 = vmatpush.msra.mxu0 %v174
  %340 = vmatpush.msra.mxu0 %v173
  %341 = vmatpush.msra.mxu0 %v172
  %342 = vmatmul.f32.gmra.mxu0 %v321
  %v343 = vpop.f32.mrf.mxu0
  %v344 = vadd.f32 %v319, %v343
  %345 = vmatmul.f32.gmra.mxu0 %v324
  %v346 = vpop.f32.mrf.mxu0
  %v347 = vadd.f32 %v319, %v346
  %348 = vdwg.mxu0
  %v349 = vadd.f32 %v32, %v344
  %v350 = vadd.f32 %v33, %v347
  %v351 = vld [vmem:[%s2 + $0x9] sm:$0x1]
  %v352 = vld [vmem:[%s2 + $0xa] sm:$0x1]
  %v353 = vsel %vm76, %v349, 0.0
  %354 = vadd.xlane.f32.xlu0 %v353
  %v355 = vpop.xlane.xlu0 %354
  %v356 = vsel %vm76, %v350, 0.0
  %357 = vadd.xlane.f32.xlu0 %v356
  %v358 = vpop.xlane.xlu0 %357
  %v359 = vrcp.pop 32.0
  %v360 = vmul.f32 32.0, %v359
  %v361 = vsub.f32 1.0, %v360
  %v362 = vmul.f32 %v359, %v361
  %v363 = vadd.f32 %v359, %v362
  %vm364 = vweird.f32 %v359
  %v365 = vsel %vm364, %v359, %v363
  %v366 = vmul.f32 %v355, %v365
  %v367 = vmul.f32 %v358, %v365
  %v368 = vsub.f32 %v349, %v366
  %v369 = vsub.f32 %v350, %v367
  %v370 = vmul.f32 %v368, %v368
  %v371 = vmul.f32 %v369, %v369
  %v372 = vsel %vm76, %v370, 0.0
  %373 = vadd.xlane.f32.xlu0 %v372
  %v374 = vpop.xlane.xlu0 %373
  %v375 = vsel %vm76, %v371, 0.0
  %376 = vadd.xlane.f32.xlu0 %v375
  %v377 = vpop.xlane.xlu0 %376
  %v378 = vmul.f32 %v374, %v365
  %v379 = vmul.f32 %v377, %v365
  %v380 = vadd.f32 %v378, 1e-05
  %v381 = vadd.f32 %v379, 1e-05
  %v382 = vrsqrt.pop %v380
  %v383 = vmul.f32 %v382, %v380
  %v384 = vmul.f32 %v383, %v382
  %v385 = vmul.f32 0.5, %v384
  %v386 = vsub.f32 1.5, %v385
  %v387 = vmul.f32 %v382, %v386
  %vm388 = vweird.f32 %v380
  %vm389 = vweird.f32 %v382
  %vm390 = vmor %vm388, %vm389
  %v391 = vsel %vm390, %v382, %v387
  %v392 = vrsqrt.pop %v381
  %v393 = vmul.f32 %v392, %v381
  %v394 = vmul.f32 %v393, %v392
  %v395 = vmul.f32 0.5, %v394
  %v396 = vsub.f32 1.5, %v395
  %v397 = vmul.f32 %v392, %v396
  %vm398 = vweird.f32 %v381
  %vm399 = vweird.f32 %v392
  %vm400 = vmor %vm398, %vm399
  %v401 = vsel %vm400, %v392, %v397
  %v402 = vmul.f32 %v368, %v391
  %v403 = vmul.f32 %v369, %v401
  %v404 = vperm.slane %v351, 0
  %v405 = vmul.f32 %v402, %v404
  %v406 = vmul.f32 %v403, %v404
  %v407 = vperm.slane %v352, 0
  %v408 = vadd.f32 %v405, %v407
  %v409 = vadd.f32 %v406, %v407
  %v410 = vadd.f32 %v408, %v34
  %v411 = vadd.f32 %v409, %v35
  %v412 = vld [vmem:[%s1 + $0x80] sm:$0xff]
  %v413 = vld [vmem:[%s1 + $0x88] sm:$0xff]
  %v414 = vld [vmem:[%s1 + $0x90] sm:$0xff]
  %v415 = vld [vmem:[%s1 + $0x98] sm:$0xff]
  %v416 = vld [vmem:[%s2 + $0x4] sm:$0x1]
  %v417 = vperm.slane %v416, 0
  %v419 = vsel %vm76, %v410, 0
  %v422 = vsel %vm76, %v411, 0
  %424 = vmatpush.msra.mxu0 0.0
  %425 = vmatpush.msra.mxu0 0.0
  %426 = vmatpush.msra.mxu0 0.0
  %427 = vmatpush.msra.mxu0 0.0
  %428 = vmatpush.msra.mxu0 0.0
  %429 = vmatpush.msra.mxu0 0.0
  %430 = vmatpush.msra.mxu0 0.0
  %431 = vmatpush.msra.mxu0 0.0
  %432 = vmatpush.msra.mxu0 0.0
  %433 = vmatpush.msra.mxu0 0.0
  %434 = vmatpush.msra.mxu0 0.0
  %435 = vmatpush.msra.mxu0 0.0
  %436 = vmatpush.msra.mxu0 %v415
  %437 = vmatpush.msra.mxu0 %v414
  %438 = vmatpush.msra.mxu0 %v413
  %439 = vmatpush.msra.mxu0 %v412
  %440 = vmatmul.f32.gmra.mxu0 %v419
  %v441 = vpop.f32.mrf.mxu0
  %v442 = vadd.f32 %v417, %v441
  %443 = vmatmul.f32.gmra.mxu0 %v422
  %v444 = vpop.f32.mrf.mxu0
  %v445 = vadd.f32 %v417, %v444
  %446 = vdwg.mxu0
  %v447 = vadd.f32 %v36, %v40
  %v448 = vadd.f32 %v37, %v41
  %v449 = vadd.f32 %v38, %v42
  %v450 = vadd.f32 %v39, %v43
  %v451 = vld [vmem:[%s1 + $0xa0] sm:$0xff]
  %v452 = vld [vmem:[%s1 + $0xa8] sm:$0xff]
  %v453 = vld [vmem:[%s1 + $0xb0] sm:$0xff]
  %v454 = vld [vmem:[%s1 + $0xb8] sm:$0xff]
  %v455 = vld [vmem:[%s2 + $0x5] sm:$0x1]
  %v456 = vperm.slane %v455, 0
  %v458 = vsel %vm76, %v447, 0
  %v461 = vsel %vm76, %v448, 0
  %v464 = vsel %vm76, %v449, 0
  %v467 = vsel %vm76, %v450, 0
  %469 = vmatpush.msra.mxu0 0.0
  %470 = vmatpush.msra.mxu0 0.0
  %471 = vmatpush.msra.mxu0 0.0
  %472 = vmatpush.msra.mxu0 0.0
  %473 = vmatpush.msra.mxu0 0.0
  %474 = vmatpush.msra.mxu0 0.0
  %475 = vmatpush.msra.mxu0 0.0
  %476 = vmatpush.msra.mxu0 0.0
  %477 = vmatpush.msra.mxu0 0.0
  %478 = vmatpush.msra.mxu0 0.0
  %479 = vmatpush.msra.mxu0 0.0
  %480 = vmatpush.msra.mxu0 0.0
  %481 = vmatpush.msra.mxu0 %v454
  %482 = vmatpush.msra.mxu0 %v453
  %483 = vmatpush.msra.mxu0 %v452
  %484 = vmatpush.msra.mxu0 %v451
  %485 = vmatmul.f32.gmra.mxu0 %v458
  %v486 = vpop.f32.mrf.mxu0
  %v487 = vadd.f32 %v456, %v486
  %488 = vmatmul.f32.gmra.mxu0 %v461
  %v489 = vpop.f32.mrf.mxu0
  %v490 = vadd.f32 %v456, %v489
  %491 = vmatmul.f32.gmra.mxu0 %v464
  %v492 = vpop.f32.mrf.mxu0
  %v493 = vadd.f32 %v456, %v492
  %494 = vmatmul.f32.gmra.mxu0 %v467
  %v495 = vpop.f32.mrf.mxu0
  %v496 = vadd.f32 %v456, %v495
  %497 = vdwg.mxu0
  %v498 = vld [vmem:[%s1 + $0xc0] sm:$0xff]
  %v499 = vld [vmem:[%s1 + $0xc8] sm:$0xff]
  %v500 = vld [vmem:[%s1 + $0xd0] sm:$0xff]
  %v501 = vld [vmem:[%s1 + $0xd8] sm:$0xff]
  %v502 = vld [vmem:[%s2 + $0x6] sm:$0x1]
  %v503 = vperm.slane %v502, 0
  %v505 = vsel %vm76, %v36, 0
  %v508 = vsel %vm76, %v37, 0
  %v511 = vsel %vm76, %v38, 0
  %v514 = vsel %vm76, %v39, 0
  %516 = vmatpush.msra.mxu0 0.0
  %517 = vmatpush.msra.mxu0 0.0
  %518 = vmatpush.msra.mxu0 0.0
  %519 = vmatpush.msra.mxu0 0.0
  %520 = vmatpush.msra.mxu0 0.0
  %521 = vmatpush.msra.mxu0 0.0
  %522 = vmatpush.msra.mxu0 0.0
  %523 = vmatpush.msra.mxu0 0.0
  %524 = vmatpush.msra.mxu0 0.0
  %525 = vmatpush.msra.mxu0 0.0
  %526 = vmatpush.msra.mxu0 0.0
  %527 = vmatpush.msra.mxu0 0.0
  %528 = vmatpush.msra.mxu0 %v501
  %529 = vmatpush.msra.mxu0 %v500
  %530 = vmatpush.msra.mxu0 %v499
  %531 = vmatpush.msra.mxu0 %v498
  %532 = vmatmul.f32.gmra.mxu0 %v505
  %v533 = vpop.f32.mrf.mxu0
  %v534 = vadd.f32 %v503, %v533
  %535 = vmatmul.f32.gmra.mxu0 %v508
  %v536 = vpop.f32.mrf.mxu0
  %v537 = vadd.f32 %v503, %v536
  %538 = vmatmul.f32.gmra.mxu0 %v511
  %v539 = vpop.f32.mrf.mxu0
  %v540 = vadd.f32 %v503, %v539
  %541 = vmatmul.f32.gmra.mxu0 %v514
  %v542 = vpop.f32.mrf.mxu0
  %v543 = vadd.f32 %v503, %v542
  %544 = vdwg.mxu0
  %v545 = vld [vmem:[%s5] sm:$0xff]
  %v546 = vld [vmem:[%s5 + $0x8] sm:$0xff]
  %v547 = vld [vmem:[%s1 + $0xe0] sm:$0xff]
  %v548 = vld [vmem:[%s1 + $0xe8] sm:$0xff]
  %v549 = vld [vmem:[%s1 + $0xf0] sm:$0xff]
  %v550 = vld [vmem:[%s1 + $0xf8] sm:$0xff]
  %v551 = vld [vmem:[%s2 + $0x7] sm:$0x1]
  %v552 = vmul.f32 %v487, %v52
  %v553 = vmul.f32 %v490, %v53
  %v554 = vmul.f32 %v493, %v54
  %v555 = vmul.f32 %v496, %v55
  %v556 = vmul.f32 %v487, %v56
  %v557 = vmul.f32 %v490, %v57
  %v558 = vmul.f32 %v493, %v58
  %v559 = vmul.f32 %v496, %v59
  %v560 = vmul.f32 %v487, %v60
  %v561 = vmul.f32 %v490, %v61
  %v562 = vmul.f32 %v493, %v62
  %v563 = vmul.f32 %v496, %v63
  %v564 = vmul.f32 %v487, %v64
  %v565 = vmul.f32 %v490, %v65
  %v566 = vmul.f32 %v493, %v66
  %v567 = vmul.f32 %v496, %v67
  %v568 = vmul.f32 %v534, %v52
  %v569 = vmul.f32 %v537, %v53
  %v570 = vmul.f32 %v540, %v54
  %v571 = vmul.f32 %v543, %v55
  %v572 = vmul.f32 %v534, %v56
  %v573 = vmul.f32 %v537, %v57
  %v574 = vmul.f32 %v540, %v58
  %v575 = vmul.f32 %v543, %v59
  %v576 = vmul.f32 %v534, %v60
  %v577 = vmul.f32 %v537, %v61
  %v578 = vmul.f32 %v540, %v62
  %v579 = vmul.f32 %v543, %v63
  %v580 = vmul.f32 %v534, %v64
  %v581 = vmul.f32 %v537, %v65
  %v582 = vmul.f32 %v540, %v66
  %v583 = vmul.f32 %v543, %v67
  %v585 = vsel %vm76, %v442, 0
  %v588 = vsel %vm76, %v445, 0
  %v591 = vsel %vm76, %v552, 0
  %v594 = vsel %vm76, %v553, 0
  %v597 = vsel %vm76, %v554, 0
  %v600 = vsel %vm76, %v555, 0
  %v603 = vsel %vm76, %v556, 0
  %v606 = vsel %vm76, %v557, 0
  %v609 = vsel %vm76, %v558, 0
  %v612 = vsel %vm76, %v559, 0
  %v615 = vsel %vm76, %v560, 0
  %v618 = vsel %vm76, %v561, 0
  %v621 = vsel %vm76, %v562, 0
  %v624 = vsel %vm76, %v563, 0
  %v627 = vsel %vm76, %v564, 0
  %v630 = vsel %vm76, %v565, 0
  %v633 = vsel %vm76, %v566, 0
  %v636 = vsel %vm76, %v567, 0
  %638 = vmatpush.xpose.msra.mxu0 %v636
  %639 = vmatpush.xpose.msra.mxu0 %v633
  %640 = vmatpush.xpose.msra.mxu0 %v630
  %641 = vmatpush.xpose.msra.mxu0 %v627
  %642 = vmatpush.xpose.msra.mxu0 %v624
  %643 = vmatpush.xpose.msra.mxu0 %v621
  %644 = vmatpush.xpose.msra.mxu0 %v618
  %645 = vmatpush.xpose.msra.mxu0 %v615
  %646 = vmatpush.xpose.msra.mxu0 %v612
  %647 = vmatpush.xpose.msra.mxu0 %v609
  %648 = vmatpush.xpose.msra.mxu0 %v606
  %649 = vmatpush.xpose.msra.mxu0 %v603
  %650 = vmatpush.xpose.msra.mxu0 %v600
  %651 = vmatpush.xpose.msra.mxu0 %v597
  %652 = vmatpush.xpose.msra.mxu0 %v594
  %653 = vmatpush.xpose.msra.mxu0 %v591
  %654 = vmatmul.f32.gmra.mxu0 %v585
  %v655 = vpop.f32.mrf.mxu0
  %v656 = vadd.f32 0.0, %v655
  %657 = vmatmul.f32.gmra.mxu0 %v588
  %v658 = vpop.f32.mrf.mxu0
  %v659 = vadd.f32 0.0, %v658
  %660 = vdwg.mxu0
  %v661 = vmul.f32 %v656, 0.35355338
  %v662 = vmul.f32 %v659, 0.35355338
  %v663 = vadd.f32 %v661, %v545
  %v664 = vadd.f32 %v662, %v546
  %665 = vmax.xlane.f32.xlu0 %v663
  %v666 = vpop.xlane.xlu0 %665
  %667 = vmax.xlane.f32.xlu0 %v664
  %v668 = vpop.xlane.xlu0 %667
  %v669 = vsub.f32 %v663, %v666
  %v670 = vsub.f32 %v664, %v668
  %v671 = vmul.f32 %v669, 1.442695
  %v672 = vpow.pop %v671
  %v673 = vmul.f32 %v670, 1.442695
  %v674 = vpow.pop %v673
  %675 = vmatpush.msra.mxu0 %v583
  %676 = vmatpush.msra.mxu0 %v582
  %677 = vmatpush.msra.mxu0 %v581
  %678 = vmatpush.msra.mxu0 %v580
  %679 = vmatpush.msra.mxu0 %v579
  %680 = vmatpush.msra.mxu0 %v578
  %681 = vmatpush.msra.mxu0 %v577
  %682 = vmatpush.msra.mxu0 %v576
  %683 = vmatpush.msra.mxu0 %v575
  %684 = vmatpush.msra.mxu0 %v574
  %685 = vmatpush.msra.mxu0 %v573
  %686 = vmatpush.msra.mxu0 %v572
  %687 = vmatpush.msra.mxu0 %v571
  %688 = vmatpush.msra.mxu0 %v570
  %689 = vmatpush.msra.mxu0 %v569
  %690 = vmatpush.msra.mxu0 %v568
  %691 = vmatmul.f32.gmra.mxu0 %v672
  %v692 = vpop.f32.mrf.mxu0
  %v693 = vadd.f32 0.0, %v692
  %694 = vmatmul.f32.gmra.mxu0 %v674
  %v695 = vpop.f32.mrf.mxu0
  %v696 = vadd.f32 0.0, %v695
  %697 = vdwg.mxu0
  %698 = vmatpush.msra.mxu0 %v67
  %699 = vmatpush.msra.mxu0 %v66
  %700 = vmatpush.msra.mxu0 %v65
  %701 = vmatpush.msra.mxu0 %v64
  %702 = vmatpush.msra.mxu0 %v63
  %703 = vmatpush.msra.mxu0 %v62
  %704 = vmatpush.msra.mxu0 %v61
  %705 = vmatpush.msra.mxu0 %v60
  %706 = vmatpush.msra.mxu0 %v59
  %707 = vmatpush.msra.mxu0 %v58
  %708 = vmatpush.msra.mxu0 %v57
  %709 = vmatpush.msra.mxu0 %v56
  %710 = vmatpush.msra.mxu0 %v55
  %711 = vmatpush.msra.mxu0 %v54
  %712 = vmatpush.msra.mxu0 %v53
  %713 = vmatpush.msra.mxu0 %v52
  %714 = vmatmul.f32.gmra.mxu0 %v672
  %v715 = vpop.f32.mrf.mxu0
  %v716 = vadd.f32 0.0, %v715
  %717 = vmatmul.f32.gmra.mxu0 %v674
  %v718 = vpop.f32.mrf.mxu0
  %v719 = vadd.f32 0.0, %v718
  %720 = vdwg.mxu0
  %v721 = vrcp.pop %v716
  %v722 = vrcp.pop %v719
  %v723 = vmul.f32 %v693, %v721
  %v724 = vmul.f32 %v696, %v722
  %v725 = vperm.slane %v551, 0
  %v727 = vsel %vm76, %v723, 0
  %v730 = vsel %vm76, %v724, 0
  %732 = vmatpush.msra.mxu0 0.0
  %733 = vmatpush.msra.mxu0 0.0
  %734 = vmatpush.msra.mxu0 0.0
  %735 = vmatpush.msra.mxu0 0.0
  %736 = vmatpush.msra.mxu0 0.0
  %737 = vmatpush.msra.mxu0 0.0
  %738 = vmatpush.msra.mxu0 0.0
  %739 = vmatpush.msra.mxu0 0.0
  %740 = vmatpush.msra.mxu0 0.0
  %741 = vmatpush.msra.mxu0 0.0
  %742 = vmatpush.msra.mxu0 0.0
  %743 = vmatpush.msra.mxu0 0.0
  %744 = vmatpush.msra.mxu0 %v550
  %745 = vmatpush.msra.mxu0 %v549
  %746 = vmatpush.msra.mxu0 %v548
  %747 = vmatpush.msra.mxu0 %v547
  %748 = vmatmul.f32.gmra.mxu0 %v727
  %v749 = vpop.f32.mrf.mxu0
  %v750 = vadd.f32 %v725, %v749
  %751 = vmatmul.f32.gmra.mxu0 %v730
  %v752 = vpop.f32.mrf.mxu0
  %v753 = vadd.f32 %v725, %v752
  %754 = vdwg.mxu0
  %v755 = vadd.f32 %v408, %v750
  %v756 = vadd.f32 %v409, %v753
  %v757 = vld [vmem:[%s2 + $0xb] sm:$0x1]
  %v758 = vld [vmem:[%s2 + $0xc] sm:$0x1]
  %v759 = vsel %vm76, %v755, 0.0
  %760 = vadd.xlane.f32.xlu0 %v759
  %v761 = vpop.xlane.xlu0 %760
  %v762 = vsel %vm76, %v756, 0.0
  %763 = vadd.xlane.f32.xlu0 %v762
  %v764 = vpop.xlane.xlu0 %763
  %v765 = vmul.f32 %v761, %v365
  %v766 = vmul.f32 %v764, %v365
  %v767 = vsub.f32 %v755, %v765
  %v768 = vsub.f32 %v756, %v766
  %v769 = vmul.f32 %v767, %v767
  %v770 = vmul.f32 %v768, %v768
  %v771 = vsel %vm76, %v769, 0.0
  %772 = vadd.xlane.f32.xlu0 %v771
  %v773 = vpop.xlane.xlu0 %772
  %v774 = vsel %vm76, %v770, 0.0
  %775 = vadd.xlane.f32.xlu0 %v774
  %v776 = vpop.xlane.xlu0 %775
  %v777 = vmul.f32 %v773, %v365
  %v778 = vmul.f32 %v776, %v365
  %v779 = vadd.f32 %v777, 1e-05
  %v780 = vadd.f32 %v778, 1e-05
  %v781 = vrsqrt.pop %v779
  %v782 = vmul.f32 %v781, %v779
  %v783 = vmul.f32 %v782, %v781
  %v784 = vmul.f32 0.5, %v783
  %v785 = vsub.f32 1.5, %v784
  %v786 = vmul.f32 %v781, %v785
  %vm787 = vweird.f32 %v779
  %vm788 = vweird.f32 %v781
  %vm789 = vmor %vm787, %vm788
  %v790 = vsel %vm789, %v781, %v786
  %v791 = vrsqrt.pop %v780
  %v792 = vmul.f32 %v791, %v780
  %v793 = vmul.f32 %v792, %v791
  %v794 = vmul.f32 0.5, %v793
  %v795 = vsub.f32 1.5, %v794
  %v796 = vmul.f32 %v791, %v795
  %vm797 = vweird.f32 %v780
  %vm798 = vweird.f32 %v791
  %vm799 = vmor %vm797, %vm798
  %v800 = vsel %vm799, %v791, %v796
  %v801 = vmul.f32 %v767, %v790
  %v802 = vmul.f32 %v768, %v800
  %v803 = vperm.slane %v757, 0
  %v804 = vmul.f32 %v801, %v803
  %v805 = vmul.f32 %v802, %v803
  %v806 = vperm.slane %v758, 0
  %v807 = vadd.f32 %v804, %v806
  %v808 = vadd.f32 %v805, %v806
  %v809 = vld [vmem:[%s6] sm:$0xff]
  %v810 = vld [vmem:[%s6 + $0x8] sm:$0xff]
  %v811 = vld [vmem:[%s6 + $0x10] sm:$0xff]
  %v812 = vld [vmem:[%s6 + $0x18] sm:$0xff]
  %v813 = vld [vmem:[%s6 + $0x20] sm:$0xff]
  %v814 = vld [vmem:[%s6 + $0x28] sm:$0xff]
  %v815 = vld [vmem:[%s6 + $0x30] sm:$0xff]
  %v816 = vld [vmem:[%s6 + $0x38] sm:$0xff]
  %v817 = vld [vmem:[%s6 + $0x40] sm:$0xff]
  %v818 = vld [vmem:[%s6 + $0x48] sm:$0xff]
  %v819 = vld [vmem:[%s6 + $0x50] sm:$0xff]
  %v820 = vld [vmem:[%s6 + $0x58] sm:$0xff]
  %v821 = vld [vmem:[%s6 + $0x60] sm:$0xff]
  %v822 = vld [vmem:[%s6 + $0x68] sm:$0xff]
  %v823 = vld [vmem:[%s6 + $0x70] sm:$0xff]
  %v824 = vld [vmem:[%s6 + $0x78] sm:$0xff]
  %v825 = vld [vmem:[%s6 + $0x80] sm:$0xff]
  %v826 = vld [vmem:[%s6 + $0x88] sm:$0xff]
  %v827 = vld [vmem:[%s6 + $0x90] sm:$0xff]
  %v828 = vld [vmem:[%s6 + $0x98] sm:$0xff]
  %v829 = vld [vmem:[%s6 + $0xa0] sm:$0xff]
  %v830 = vld [vmem:[%s6 + $0xa8] sm:$0xff]
  %v831 = vld [vmem:[%s6 + $0xb0] sm:$0xff]
  %v832 = vld [vmem:[%s6 + $0xb8] sm:$0xff]
  %v833 = vld [vmem:[%s6 + $0xc0] sm:$0xff]
  %v834 = vld [vmem:[%s6 + $0xc8] sm:$0xff]
  %v835 = vld [vmem:[%s6 + $0xd0] sm:$0xff]
  %v836 = vld [vmem:[%s6 + $0xd8] sm:$0xff]
  %v837 = vld [vmem:[%s6 + $0xe0] sm:$0xff]
  %v838 = vld [vmem:[%s6 + $0xe8] sm:$0xff]
  %v839 = vld [vmem:[%s6 + $0xf0] sm:$0xff]
  %v840 = vld [vmem:[%s6 + $0xf8] sm:$0xff]
  %v841 = vld [vmem:[%s6 + $0x100] sm:$0xff]
  %v842 = vld [vmem:[%s6 + $0x108] sm:$0xff]
  %v843 = vld [vmem:[%s6 + $0x110] sm:$0xff]
  %v844 = vld [vmem:[%s6 + $0x118] sm:$0xff]
  %v845 = vld [vmem:[%s6 + $0x120] sm:$0xff]
  %v846 = vld [vmem:[%s6 + $0x128] sm:$0xff]
  %v847 = vld [vmem:[%s6 + $0x130] sm:$0xff]
  %v848 = vld [vmem:[%s6 + $0x138] sm:$0xff]
  %v849 = vld [vmem:[%s6 + $0x140] sm:$0xff]
  %v850 = vld [vmem:[%s6 + $0x148] sm:$0xff]
  %v851 = vld [vmem:[%s6 + $0x150] sm:$0xff]
  %v852 = vld [vmem:[%s6 + $0x158] sm:$0xff]
  %v853 = vld [vmem:[%s6 + $0x160] sm:$0xff]
  %v854 = vld [vmem:[%s6 + $0x168] sm:$0xff]
  %v855 = vld [vmem:[%s6 + $0x170] sm:$0xff]
  %v856 = vld [vmem:[%s6 + $0x178] sm:$0xff]
  %v857 = vld [vmem:[%s6 + $0x180] sm:$0xff]
  %v858 = vld [vmem:[%s6 + $0x188] sm:$0xff]
  %v859 = vld [vmem:[%s6 + $0x190] sm:$0xff]
  %v860 = vld [vmem:[%s6 + $0x198] sm:$0xff]
  %v861 = vld [vmem:[%s6 + $0x1a0] sm:$0xff]
  %v862 = vld [vmem:[%s6 + $0x1a8] sm:$0xff]
  %v863 = vld [vmem:[%s6 + $0x1b0] sm:$0xff]
  %v864 = vld [vmem:[%s6 + $0x1b8] sm:$0xff]
  %v865 = vld [vmem:[%s6 + $0x1c0] sm:$0xff]
  %v866 = vld [vmem:[%s6 + $0x1c8] sm:$0xff]
  %v867 = vld [vmem:[%s6 + $0x1d0] sm:$0xff]
  %v868 = vld [vmem:[%s6 + $0x1d8] sm:$0xff]
  %v869 = vld [vmem:[%s6 + $0x1e0] sm:$0xff]
  %v870 = vld [vmem:[%s6 + $0x1e8] sm:$0xff]
  %v871 = vld [vmem:[%s6 + $0x1f0] sm:$0xff]
  %v872 = vld [vmem:[%s6 + $0x1f8] sm:$0xff]
  %v873 = vld [vmem:[%s7] sm:$0xff]
  %v874 = vld [vmem:[%s7 + $0x8] sm:$0xff]
  %v877 = vperm.slane %v873, 0
  %v878 = vperm.slane %v873, 1
  %v879 = vperm.slane %v873, 2
  %v880 = vperm.slane %v873, 3
  %v881 = vperm.slane %v873, 4
  %v882 = vperm.slane %v873, 5
  %v883 = vperm.slane %v873, 6
  %v884 = vperm.slane %v873, 7
  %v885 = vperm.slane %v874, 0
  %v886 = vperm.slane %v874, 1
  %v887 = vperm.slane %v874, 2
  %v888 = vperm.slane %v874, 3
  %v889 = vperm.slane %v874, 4
  %v890 = vperm.slane %v874, 5
  %v891 = vperm.slane %v874, 6
  %v892 = vperm.slane %v874, 7
  %v910 = vsel %vm76, %v807, 0
  %v913 = vsel %vm76, %v808, 0
  %915 = vmatpush.msra.mxu0 0.0
  %916 = vmatpush.msra.mxu0 0.0
  %917 = vmatpush.msra.mxu0 0.0
  %918 = vmatpush.msra.mxu0 0.0
  %919 = vmatpush.msra.mxu0 0.0
  %920 = vmatpush.msra.mxu0 0.0
  %921 = vmatpush.msra.mxu0 0.0
  %922 = vmatpush.msra.mxu0 0.0
  %923 = vmatpush.msra.mxu0 0.0
  %924 = vmatpush.msra.mxu0 0.0
  %925 = vmatpush.msra.mxu0 0.0
  %926 = vmatpush.msra.mxu0 0.0
  %927 = vmatpush.msra.mxu0 %v857
  %928 = vmatpush.msra.mxu0 %v841
  %929 = vmatpush.msra.mxu0 %v825
  %930 = vmatpush.msra.mxu0 %v809
  %931 = vmatmul.f32.gmra.mxu0 %v910
  %v932 = vpop.f32.mrf.mxu0
  %v933 = vadd.f32 %v877, %v932
  %934 = vmatmul.f32.gmra.mxu0 %v913
  %v935 = vpop.f32.mrf.mxu0
  %v936 = vadd.f32 %v877, %v935
  %937 = vdwg.mxu0
  %938 = vmatpush.msra.mxu0 0.0
  %939 = vmatpush.msra.mxu0 0.0
  %940 = vmatpush.msra.mxu0 0.0
  %941 = vmatpush.msra.mxu0 0.0
  %942 = vmatpush.msra.mxu0 0.0
  %943 = vmatpush.msra.mxu0 0.0
  %944 = vmatpush.msra.mxu0 0.0
  %945 = vmatpush.msra.mxu0 0.0
  %946 = vmatpush.msra.mxu0 0.0
  %947 = vmatpush.msra.mxu0 0.0
  %948 = vmatpush.msra.mxu0 0.0
  %949 = vmatpush.msra.mxu0 0.0
  %950 = vmatpush.msra.mxu0 %v858
  %951 = vmatpush.msra.mxu0 %v842
  %952 = vmatpush.msra.mxu0 %v826
  %953 = vmatpush.msra.mxu0 %v810
  %954 = vmatmul.f32.gmra.mxu0 %v910
  %v955 = vpop.f32.mrf.mxu0
  %v956 = vadd.f32 %v878, %v955
  %957 = vmatmul.f32.gmra.mxu0 %v913
  %v958 = vpop.f32.mrf.mxu0
  %v959 = vadd.f32 %v878, %v958
  %960 = vdwg.mxu0
  %961 = vmatpush.msra.mxu0 0.0
  %962 = vmatpush.msra.mxu0 0.0
  %963 = vmatpush.msra.mxu0 0.0
  %964 = vmatpush.msra.mxu0 0.0
  %965 = vmatpush.msra.mxu0 0.0
  %966 = vmatpush.msra.mxu0 0.0
  %967 = vmatpush.msra.mxu0 0.0
  %968 = vmatpush.msra.mxu0 0.0
  %969 = vmatpush.msra.mxu0 0.0
  %970 = vmatpush.msra.mxu0 0.0
  %971 = vmatpush.msra.mxu0 0.0
  %972 = vmatpush.msra.mxu0 0.0
  %973 = vmatpush.msra.mxu0 %v859
  %974 = vmatpush.msra.mxu0 %v843
  %975 = vmatpush.msra.mxu0 %v827
  %976 = vmatpush.msra.mxu0 %v811
  %977 = vmatmul.f32.gmra.mxu0 %v910
  %v978 = vpop.f32.mrf.mxu0
  %v979 = vadd.f32 %v879, %v978
  %980 = vmatmul.f32.gmra.mxu0 %v913
  %v981 = vpop.f32.mrf.mxu0
  %v982 = vadd.f32 %v879, %v981
  %983 = vdwg.mxu0
  %984 = vmatpush.msra.mxu0 0.0
  %985 = vmatpush.msra.mxu0 0.0
  %986 = vmatpush.msra.mxu0 0.0
  %987 = vmatpush.msra.mxu0 0.0
  %988 = vmatpush.msra.mxu0 0.0
  %989 = vmatpush.msra.mxu0 0.0
  %990 = vmatpush.msra.mxu0 0.0
  %991 = vmatpush.msra.mxu0 0.0
  %992 = vmatpush.msra.mxu0 0.0
  %993 = vmatpush.msra.mxu0 0.0
  %994 = vmatpush.msra.mxu0 0.0
  %995 = vmatpush.msra.mxu0 0.0
  %996 = vmatpush.msra.mxu0 %v860
  %997 = vmatpush.msra.mxu0 %v844
  %998 = vmatpush.msra.mxu0 %v828
  %999 = vmatpush.msra.mxu0 %v812
  %1000 = vmatmul.f32.gmra.mxu0 %v910
  %v1001 = vpop.f32.mrf.mxu0
  %v1002 = vadd.f32 %v880, %v1001
  %1003 = vmatmul.f32.gmra.mxu0 %v913
  %v1004 = vpop.f32.mrf.mxu0
  %v1005 = vadd.f32 %v880, %v1004
  %1006 = vdwg.mxu0
  %1007 = vmatpush.msra.mxu0 0.0
  %1008 = vmatpush.msra.mxu0 0.0
  %1009 = vmatpush.msra.mxu0 0.0
  %1010 = vmatpush.msra.mxu0 0.0
  %1011 = vmatpush.msra.mxu0 0.0
  %1012 = vmatpush.msra.mxu0 0.0
  %1013 = vmatpush.msra.mxu0 0.0
  %1014 = vmatpush.msra.mxu0 0.0
  %1015 = vmatpush.msra.mxu0 0.0
  %1016 = vmatpush.msra.mxu0 0.0
  %1017 = vmatpush.msra.mxu0 0.0
  %1018 = vmatpush.msra.mxu0 0.0
  %1019 = vmatpush.msra.mxu0 %v861
  %1020 = vmatpush.msra.mxu0 %v845
  %1021 = vmatpush.msra.mxu0 %v829
  %1022 = vmatpush.msra.mxu0 %v813
  %1023 = vmatmul.f32.gmra.mxu0 %v910
  %v1024 = vpop.f32.mrf.mxu0
  %v1025 = vadd.f32 %v881, %v1024
  %1026 = vmatmul.f32.gmra.mxu0 %v913
  %v1027 = vpop.f32.mrf.mxu0
  %v1028 = vadd.f32 %v881, %v1027
  %1029 = vdwg.mxu0
  %1030 = vmatpush.msra.mxu0 0.0
  %1031 = vmatpush.msra.mxu0 0.0
  %1032 = vmatpush.msra.mxu0 0.0
  %1033 = vmatpush.msra.mxu0 0.0
  %1034 = vmatpush.msra.mxu0 0.0
  %1035 = vmatpush.msra.mxu0 0.0
  %1036 = vmatpush.msra.mxu0 0.0
  %1037 = vmatpush.msra.mxu0 0.0
  %1038 = vmatpush.msra.mxu0 0.0
  %1039 = vmatpush.msra.mxu0 0.0
  %1040 = vmatpush.msra.mxu0 0.0
  %1041 = vmatpush.msra.mxu0 0.0
  %1042 = vmatpush.msra.mxu0 %v862
  %1043 = vmatpush.msra.mxu0 %v846
  %1044 = vmatpush.msra.mxu0 %v830
  %1045 = vmatpush.msra.mxu0 %v814
  %1046 = vmatmul.f32.gmra.mxu0 %v910
  %v1047 = vpop.f32.mrf.mxu0
  %v1048 = vadd.f32 %v882, %v1047
  %1049 = vmatmul.f32.gmra.mxu0 %v913
  %v1050 = vpop.f32.mrf.mxu0
  %v1051 = vadd.f32 %v882, %v1050
  %1052 = vdwg.mxu0
  %1053 = vmatpush.msra.mxu0 0.0
  %1054 = vmatpush.msra.mxu0 0.0
  %1055 = vmatpush.msra.mxu0 0.0
  %1056 = vmatpush.msra.mxu0 0.0
  %1057 = vmatpush.msra.mxu0 0.0
  %1058 = vmatpush.msra.mxu0 0.0
  %1059 = vmatpush.msra.mxu0 0.0
  %1060 = vmatpush.msra.mxu0 0.0
  %1061 = vmatpush.msra.mxu0 0.0
  %1062 = vmatpush.msra.mxu0 0.0
  %1063 = vmatpush.msra.mxu0 0.0
  %1064 = vmatpush.msra.mxu0 0.0
  %1065 = vmatpush.msra.mxu0 %v863
  %1066 = vmatpush.msra.mxu0 %v847
  %1067 = vmatpush.msra.mxu0 %v831
  %1068 = vmatpush.msra.mxu0 %v815
  %1069 = vmatmul.f32.gmra.mxu0 %v910
  %v1070 = vpop.f32.mrf.mxu0
  %v1071 = vadd.f32 %v883, %v1070
  %1072 = vmatmul.f32.gmra.mxu0 %v913
  %v1073 = vpop.f32.mrf.mxu0
  %v1074 = vadd.f32 %v883, %v1073
  %1075 = vdwg.mxu0
  %1076 = vmatpush.msra.mxu0 0.0
  %1077 = vmatpush.msra.mxu0 0.0
  %1078 = vmatpush.msra.mxu0 0.0
  %1079 = vmatpush.msra.mxu0 0.0
  %1080 = vmatpush.msra.mxu0 0.0
  %1081 = vmatpush.msra.mxu0 0.0
  %1082 = vmatpush.msra.mxu0 0.0
  %1083 = vmatpush.msra.mxu0 0.0
  %1084 = vmatpush.msra.mxu0 0.0
  %1085 = vmatpush.msra.mxu0 0.0
  %1086 = vmatpush.msra.mxu0 0.0
  %1087 = vmatpush.msra.mxu0 0.0
  %1088 = vmatpush.msra.mxu0 %v864
  %1089 = vmatpush.msra.mxu0 %v848
  %1090 = vmatpush.msra.mxu0 %v832
  %1091 = vmatpush.msra.mxu0 %v816
  %1092 = vmatmul.f32.gmra.mxu0 %v910
  %v1093 = vpop.f32.mrf.mxu0
  %v1094 = vadd.f32 %v884, %v1093
  %1095 = vmatmul.f32.gmra.mxu0 %v913
  %v1096 = vpop.f32.mrf.mxu0
  %v1097 = vadd.f32 %v884, %v1096
  %1098 = vdwg.mxu0
  %1099 = vmatpush.msra.mxu0 0.0
  %1100 = vmatpush.msra.mxu0 0.0
  %1101 = vmatpush.msra.mxu0 0.0
  %1102 = vmatpush.msra.mxu0 0.0
  %1103 = vmatpush.msra.mxu0 0.0
  %1104 = vmatpush.msra.mxu0 0.0
  %1105 = vmatpush.msra.mxu0 0.0
  %1106 = vmatpush.msra.mxu0 0.0
  %1107 = vmatpush.msra.mxu0 0.0
  %1108 = vmatpush.msra.mxu0 0.0
  %1109 = vmatpush.msra.mxu0 0.0
  %1110 = vmatpush.msra.mxu0 0.0
  %1111 = vmatpush.msra.mxu0 %v865
  %1112 = vmatpush.msra.mxu0 %v849
  %1113 = vmatpush.msra.mxu0 %v833
  %1114 = vmatpush.msra.mxu0 %v817
  %1115 = vmatmul.f32.gmra.mxu0 %v910
  %v1116 = vpop.f32.mrf.mxu0
  %v1117 = vadd.f32 %v885, %v1116
  %1118 = vmatmul.f32.gmra.mxu0 %v913
  %v1119 = vpop.f32.mrf.mxu0
  %v1120 = vadd.f32 %v885, %v1119
  %1121 = vdwg.mxu0
  %1122 = vmatpush.msra.mxu0 0.0
  %1123 = vmatpush.msra.mxu0 0.0
  %1124 = vmatpush.msra.mxu0 0.0
  %1125 = vmatpush.msra.mxu0 0.0
  %1126 = vmatpush.msra.mxu0 0.0
  %1127 = vmatpush.msra.mxu0 0.0
  %1128 = vmatpush.msra.mxu0 0.0
  %1129 = vmatpush.msra.mxu0 0.0
  %1130 = vmatpush.msra.mxu0 0.0
  %1131 = vmatpush.msra.mxu0 0.0
  %1132 = vmatpush.msra.mxu0 0.0
  %1133 = vmatpush.msra.mxu0 0.0
  %1134 = vmatpush.msra.mxu0 %v866
  %1135 = vmatpush.msra.mxu0 %v850
  %1136 = vmatpush.msra.mxu0 %v834
  %1137 = vmatpush.msra.mxu0 %v818
  %1138 = vmatmul.f32.gmra.mxu0 %v910
  %v1139 = vpop.f32.mrf.mxu0
  %v1140 = vadd.f32 %v886, %v1139
  %1141 = vmatmul.f32.gmra.mxu0 %v913
  %v1142 = vpop.f32.mrf.mxu0
  %v1143 = vadd.f32 %v886, %v1142
  %1144 = vdwg.mxu0
  %1145 = vmatpush.msra.mxu0 0.0
  %1146 = vmatpush.msra.mxu0 0.0
  %1147 = vmatpush.msra.mxu0 0.0
  %1148 = vmatpush.msra.mxu0 0.0
  %1149 = vmatpush.msra.mxu0 0.0
  %1150 = vmatpush.msra.mxu0 0.0
  %1151 = vmatpush.msra.mxu0 0.0
  %1152 = vmatpush.msra.mxu0 0.0
  %1153 = vmatpush.msra.mxu0 0.0
  %1154 = vmatpush.msra.mxu0 0.0
  %1155 = vmatpush.msra.mxu0 0.0
  %1156 = vmatpush.msra.mxu0 0.0
  %1157 = vmatpush.msra.mxu0 %v867
  %1158 = vmatpush.msra.mxu0 %v851
  %1159 = vmatpush.msra.mxu0 %v835
  %1160 = vmatpush.msra.mxu0 %v819
  %1161 = vmatmul.f32.gmra.mxu0 %v910
  %v1162 = vpop.f32.mrf.mxu0
  %v1163 = vadd.f32 %v887, %v1162
  %1164 = vmatmul.f32.gmra.mxu0 %v913
  %v1165 = vpop.f32.mrf.mxu0
  %v1166 = vadd.f32 %v887, %v1165
  %1167 = vdwg.mxu0
  %1168 = vmatpush.msra.mxu0 0.0
  %1169 = vmatpush.msra.mxu0 0.0
  %1170 = vmatpush.msra.mxu0 0.0
  %1171 = vmatpush.msra.mxu0 0.0
  %1172 = vmatpush.msra.mxu0 0.0
  %1173 = vmatpush.msra.mxu0 0.0
  %1174 = vmatpush.msra.mxu0 0.0
  %1175 = vmatpush.msra.mxu0 0.0
  %1176 = vmatpush.msra.mxu0 0.0
  %1177 = vmatpush.msra.mxu0 0.0
  %1178 = vmatpush.msra.mxu0 0.0
  %1179 = vmatpush.msra.mxu0 0.0
  %1180 = vmatpush.msra.mxu0 %v868
  %1181 = vmatpush.msra.mxu0 %v852
  %1182 = vmatpush.msra.mxu0 %v836
  %1183 = vmatpush.msra.mxu0 %v820
  %1184 = vmatmul.f32.gmra.mxu0 %v910
  %v1185 = vpop.f32.mrf.mxu0
  %v1186 = vadd.f32 %v888, %v1185
  %1187 = vmatmul.f32.gmra.mxu0 %v913
  %v1188 = vpop.f32.mrf.mxu0
  %v1189 = vadd.f32 %v888, %v1188
  %1190 = vdwg.mxu0
  %1191 = vmatpush.msra.mxu0 0.0
  %1192 = vmatpush.msra.mxu0 0.0
  %1193 = vmatpush.msra.mxu0 0.0
  %1194 = vmatpush.msra.mxu0 0.0
  %1195 = vmatpush.msra.mxu0 0.0
  %1196 = vmatpush.msra.mxu0 0.0
  %1197 = vmatpush.msra.mxu0 0.0
  %1198 = vmatpush.msra.mxu0 0.0
  %1199 = vmatpush.msra.mxu0 0.0
  %1200 = vmatpush.msra.mxu0 0.0
  %1201 = vmatpush.msra.mxu0 0.0
  %1202 = vmatpush.msra.mxu0 0.0
  %1203 = vmatpush.msra.mxu0 %v869
  %1204 = vmatpush.msra.mxu0 %v853
  %1205 = vmatpush.msra.mxu0 %v837
  %1206 = vmatpush.msra.mxu0 %v821
  %1207 = vmatmul.f32.gmra.mxu0 %v910
  %v1208 = vpop.f32.mrf.mxu0
  %v1209 = vadd.f32 %v889, %v1208
  %1210 = vmatmul.f32.gmra.mxu0 %v913
  %v1211 = vpop.f32.mrf.mxu0
  %v1212 = vadd.f32 %v889, %v1211
  %1213 = vdwg.mxu0
  %1214 = vmatpush.msra.mxu0 0.0
  %1215 = vmatpush.msra.mxu0 0.0
  %1216 = vmatpush.msra.mxu0 0.0
  %1217 = vmatpush.msra.mxu0 0.0
  %1218 = vmatpush.msra.mxu0 0.0
  %1219 = vmatpush.msra.mxu0 0.0
  %1220 = vmatpush.msra.mxu0 0.0
  %1221 = vmatpush.msra.mxu0 0.0
  %1222 = vmatpush.msra.mxu0 0.0
  %1223 = vmatpush.msra.mxu0 0.0
  %1224 = vmatpush.msra.mxu0 0.0
  %1225 = vmatpush.msra.mxu0 0.0
  %1226 = vmatpush.msra.mxu0 %v870
  %1227 = vmatpush.msra.mxu0 %v854
  %1228 = vmatpush.msra.mxu0 %v838
  %1229 = vmatpush.msra.mxu0 %v822
  %1230 = vmatmul.f32.gmra.mxu0 %v910
  %v1231 = vpop.f32.mrf.mxu0
  %v1232 = vadd.f32 %v890, %v1231
  %1233 = vmatmul.f32.gmra.mxu0 %v913
  %v1234 = vpop.f32.mrf.mxu0
  %v1235 = vadd.f32 %v890, %v1234
  %1236 = vdwg.mxu0
  %1237 = vmatpush.msra.mxu0 0.0
  %1238 = vmatpush.msra.mxu0 0.0
  %1239 = vmatpush.msra.mxu0 0.0
  %1240 = vmatpush.msra.mxu0 0.0
  %1241 = vmatpush.msra.mxu0 0.0
  %1242 = vmatpush.msra.mxu0 0.0
  %1243 = vmatpush.msra.mxu0 0.0
  %1244 = vmatpush.msra.mxu0 0.0
  %1245 = vmatpush.msra.mxu0 0.0
  %1246 = vmatpush.msra.mxu0 0.0
  %1247 = vmatpush.msra.mxu0 0.0
  %1248 = vmatpush.msra.mxu0 0.0
  %1249 = vmatpush.msra.mxu0 %v871
  %1250 = vmatpush.msra.mxu0 %v855
  %1251 = vmatpush.msra.mxu0 %v839
  %1252 = vmatpush.msra.mxu0 %v823
  %1253 = vmatmul.f32.gmra.mxu0 %v910
  %v1254 = vpop.f32.mrf.mxu0
  %v1255 = vadd.f32 %v891, %v1254
  %1256 = vmatmul.f32.gmra.mxu0 %v913
  %v1257 = vpop.f32.mrf.mxu0
  %v1258 = vadd.f32 %v891, %v1257
  %1259 = vdwg.mxu0
  %1260 = vmatpush.msra.mxu0 0.0
  %1261 = vmatpush.msra.mxu0 0.0
  %1262 = vmatpush.msra.mxu0 0.0
  %1263 = vmatpush.msra.mxu0 0.0
  %1264 = vmatpush.msra.mxu0 0.0
  %1265 = vmatpush.msra.mxu0 0.0
  %1266 = vmatpush.msra.mxu0 0.0
  %1267 = vmatpush.msra.mxu0 0.0
  %1268 = vmatpush.msra.mxu0 0.0
  %1269 = vmatpush.msra.mxu0 0.0
  %1270 = vmatpush.msra.mxu0 0.0
  %1271 = vmatpush.msra.mxu0 0.0
  %1272 = vmatpush.msra.mxu0 %v872
  %1273 = vmatpush.msra.mxu0 %v856
  %1274 = vmatpush.msra.mxu0 %v840
  %1275 = vmatpush.msra.mxu0 %v824
  %1276 = vmatmul.f32.gmra.mxu0 %v910
  %v1277 = vpop.f32.mrf.mxu0
  %v1278 = vadd.f32 %v892, %v1277
  %1279 = vmatmul.f32.gmra.mxu0 %v913
  %v1280 = vpop.f32.mrf.mxu0
  %v1281 = vadd.f32 %v892, %v1280
  %1282 = vdwg.mxu0
  %v1283 = vmax.f32 %v933, 0.0
  %v1284 = vmax.f32 %v956, 0.0
  %v1285 = vmax.f32 %v979, 0.0
  %v1286 = vmax.f32 %v1002, 0.0
  %v1287 = vmax.f32 %v1025, 0.0
  %v1288 = vmax.f32 %v1048, 0.0
  %v1289 = vmax.f32 %v1071, 0.0
  %v1290 = vmax.f32 %v1094, 0.0
  %v1291 = vmax.f32 %v1117, 0.0
  %v1292 = vmax.f32 %v1140, 0.0
  %v1293 = vmax.f32 %v1163, 0.0
  %v1294 = vmax.f32 %v1186, 0.0
  %v1295 = vmax.f32 %v1209, 0.0
  %v1296 = vmax.f32 %v1232, 0.0
  %v1297 = vmax.f32 %v1255, 0.0
  %v1298 = vmax.f32 %v1278, 0.0
  %v1299 = vmax.f32 %v936, 0.0
  %v1300 = vmax.f32 %v959, 0.0
  %v1301 = vmax.f32 %v982, 0.0
  %v1302 = vmax.f32 %v1005, 0.0
  %v1303 = vmax.f32 %v1028, 0.0
  %v1304 = vmax.f32 %v1051, 0.0
  %v1305 = vmax.f32 %v1074, 0.0
  %v1306 = vmax.f32 %v1097, 0.0
  %v1307 = vmax.f32 %v1120, 0.0
  %v1308 = vmax.f32 %v1143, 0.0
  %v1309 = vmax.f32 %v1166, 0.0
  %v1310 = vmax.f32 %v1189, 0.0
  %v1311 = vmax.f32 %v1212, 0.0
  %v1312 = vmax.f32 %v1235, 0.0
  %v1313 = vmax.f32 %v1258, 0.0
  %v1314 = vmax.f32 %v1281, 0.0
  %v1315 = vld [vmem:[%s8] sm:$0xff]
  %v1316 = vld [vmem:[%s8 + $0x8] sm:$0xff]
  %v1317 = vld [vmem:[%s8 + $0x10] sm:$0xff]
  %v1318 = vld [vmem:[%s8 + $0x18] sm:$0xff]
  %v1319 = vld [vmem:[%s8 + $0x20] sm:$0xff]
  %v1320 = vld [vmem:[%s8 + $0x28] sm:$0xff]
  %v1321 = vld [vmem:[%s8 + $0x30] sm:$0xff]
  %v1322 = vld [vmem:[%s8 + $0x38] sm:$0xff]
  %v1323 = vld [vmem:[%s8 + $0x40] sm:$0xff]
  %v1324 = vld [vmem:[%s8 + $0x48] sm:$0xff]
  %v1325 = vld [vmem:[%s8 + $0x50] sm:$0xff]
  %v1326 = vld [vmem:[%s8 + $0x58] sm:$0xff]
  %v1327 = vld [vmem:[%s8 + $0x60] sm:$0xff]
  %v1328 = vld [vmem:[%s8 + $0x68] sm:$0xff]
  %v1329 = vld [vmem:[%s8 + $0x70] sm:$0xff]
  %v1330 = vld [vmem:[%s8 + $0x78] sm:$0xff]
  %v1331 = vld [vmem:[%s8 + $0x80] sm:$0xff]
  %v1332 = vld [vmem:[%s8 + $0x88] sm:$0xff]
  %v1333 = vld [vmem:[%s8 + $0x90] sm:$0xff]
  %v1334 = vld [vmem:[%s8 + $0x98] sm:$0xff]
  %v1335 = vld [vmem:[%s8 + $0xa0] sm:$0xff]
  %v1336 = vld [vmem:[%s8 + $0xa8] sm:$0xff]
  %v1337 = vld [vmem:[%s8 + $0xb0] sm:$0xff]
  %v1338 = vld [vmem:[%s8 + $0xb8] sm:$0xff]
  %v1339 = vld [vmem:[%s8 + $0xc0] sm:$0xff]
  %v1340 = vld [vmem:[%s8 + $0xc8] sm:$0xff]
  %v1341 = vld [vmem:[%s8 + $0xd0] sm:$0xff]
  %v1342 = vld [vmem:[%s8 + $0xd8] sm:$0xff]
  %v1343 = vld [vmem:[%s8 + $0xe0] sm:$0xff]
  %v1344 = vld [vmem:[%s8 + $0xe8] sm:$0xff]
  %v1345 = vld [vmem:[%s8 + $0xf0] sm:$0xff]
  %v1346 = vld [vmem:[%s8 + $0xf8] sm:$0xff]
  %v1347 = vld [vmem:[%s8 + $0x100] sm:$0xff]
  %v1348 = vld [vmem:[%s8 + $0x108] sm:$0xff]
  %v1349 = vld [vmem:[%s8 + $0x110] sm:$0xff]
  %v1350 = vld [vmem:[%s8 + $0x118] sm:$0xff]
  %v1351 = vld [vmem:[%s8 + $0x120] sm:$0xff]
  %v1352 = vld [vmem:[%s8 + $0x128] sm:$0xff]
  %v1353 = vld [vmem:[%s8 + $0x130] sm:$0xff]
  %v1354 = vld [vmem:[%s8 + $0x138] sm:$0xff]
  %v1355 = vld [vmem:[%s8 + $0x140] sm:$0xff]
  %v1356 = vld [vmem:[%s8 + $0x148] sm:$0xff]
  %v1357 = vld [vmem:[%s8 + $0x150] sm:$0xff]
  %v1358 = vld [vmem:[%s8 + $0x158] sm:$0xff]
  %v1359 = vld [vmem:[%s8 + $0x160] sm:$0xff]
  %v1360 = vld [vmem:[%s8 + $0x168] sm:$0xff]
  %v1361 = vld [vmem:[%s8 + $0x170] sm:$0xff]
  %v1362 = vld [vmem:[%s8 + $0x178] sm:$0xff]
  %v1363 = vld [vmem:[%s8 + $0x180] sm:$0xff]
  %v1364 = vld [vmem:[%s8 + $0x188] sm:$0xff]
  %v1365 = vld [vmem:[%s8 + $0x190] sm:$0xff]
  %v1366 = vld [vmem:[%s8 + $0x198] sm:$0xff]
  %v1367 = vld [vmem:[%s8 + $0x1a0] sm:$0xff]
  %v1368 = vld [vmem:[%s8 + $0x1a8] sm:$0xff]
  %v1369 = vld [vmem:[%s8 + $0x1b0] sm:$0xff]
  %v1370 = vld [vmem:[%s8 + $0x1b8] sm:$0xff]
  %v1371 = vld [vmem:[%s8 + $0x1c0] sm:$0xff]
  %v1372 = vld [vmem:[%s8 + $0x1c8] sm:$0xff]
  %v1373 = vld [vmem:[%s8 + $0x1d0] sm:$0xff]
  %v1374 = vld [vmem:[%s8 + $0x1d8] sm:$0xff]
  %v1375 = vld [vmem:[%s8 + $0x1e0] sm:$0xff]
  %v1376 = vld [vmem:[%s8 + $0x1e8] sm:$0xff]
  %v1377 = vld [vmem:[%s8 + $0x1f0] sm:$0xff]
  %v1378 = vld [vmem:[%s8 + $0x1f8] sm:$0xff]
  %v1379 = vld [vmem:[%s8 + $0x200] sm:$0xff]
  %v1380 = vld [vmem:[%s8 + $0x208] sm:$0xff]
  %v1381 = vld [vmem:[%s8 + $0x210] sm:$0xff]
  %v1382 = vld [vmem:[%s8 + $0x218] sm:$0xff]
  %v1383 = vld [vmem:[%s8 + $0x220] sm:$0xff]
  %v1384 = vld [vmem:[%s8 + $0x228] sm:$0xff]
  %v1385 = vld [vmem:[%s8 + $0x230] sm:$0xff]
  %v1386 = vld [vmem:[%s8 + $0x238] sm:$0xff]
  %v1387 = vld [vmem:[%s8 + $0x240] sm:$0xff]
  %v1388 = vld [vmem:[%s8 + $0x248] sm:$0xff]
  %v1389 = vld [vmem:[%s8 + $0x250] sm:$0xff]
  %v1390 = vld [vmem:[%s8 + $0x258] sm:$0xff]
  %v1391 = vld [vmem:[%s8 + $0x260] sm:$0xff]
  %v1392 = vld [vmem:[%s8 + $0x268] sm:$0xff]
  %v1393 = vld [vmem:[%s8 + $0x270] sm:$0xff]
  %v1394 = vld [vmem:[%s8 + $0x278] sm:$0xff]
  %v1395 = vld [vmem:[%s8 + $0x280] sm:$0xff]
  %v1396 = vld [vmem:[%s8 + $0x288] sm:$0xff]
  %v1397 = vld [vmem:[%s8 + $0x290] sm:$0xff]
  %v1398 = vld [vmem:[%s8 + $0x298] sm:$0xff]
  %v1399 = vld [vmem:[%s8 + $0x2a0] sm:$0xff]
  %v1400 = vld [vmem:[%s8 + $0x2a8] sm:$0xff]
  %v1401 = vld [vmem:[%s8 + $0x2b0] sm:$0xff]
  %v1402 = vld [vmem:[%s8 + $0x2b8] sm:$0xff]
  %v1403 = vld [vmem:[%s8 + $0x2c0] sm:$0xff]
  %v1404 = vld [vmem:[%s8 + $0x2c8] sm:$0xff]
  %v1405 = vld [vmem:[%s8 + $0x2d0] sm:$0xff]
  %v1406 = vld [vmem:[%s8 + $0x2d8] sm:$0xff]
  %v1407 = vld [vmem:[%s8 + $0x2e0] sm:$0xff]
  %v1408 = vld [vmem:[%s8 + $0x2e8] sm:$0xff]
  %v1409 = vld [vmem:[%s8 + $0x2f0] sm:$0xff]
  %v1410 = vld [vmem:[%s8 + $0x2f8] sm:$0xff]
  %v1411 = vld [vmem:[%s8 + $0x300] sm:$0xff]
  %v1412 = vld [vmem:[%s8 + $0x308] sm:$0xff]
  %v1413 = vld [vmem:[%s8 + $0x310] sm:$0xff]
  %v1414 = vld [vmem:[%s8 + $0x318] sm:$0xff]
  %v1415 = vld [vmem:[%s8 + $0x320] sm:$0xff]
  %v1416 = vld [vmem:[%s8 + $0x328] sm:$0xff]
  %v1417 = vld [vmem:[%s8 + $0x330] sm:$0xff]
  %v1418 = vld [vmem:[%s8 + $0x338] sm:$0xff]
  %v1419 = vld [vmem:[%s8 + $0x340] sm:$0xff]
  %v1420 = vld [vmem:[%s8 + $0x348] sm:$0xff]
  %v1421 = vld [vmem:[%s8 + $0x350] sm:$0xff]
  %v1422 = vld [vmem:[%s8 + $0x358] sm:$0xff]
  %v1423 = vld [vmem:[%s8 + $0x360] sm:$0xff]
  %v1424 = vld [vmem:[%s8 + $0x368] sm:$0xff]
  %v1425 = vld [vmem:[%s8 + $0x370] sm:$0xff]
  %v1426 = vld [vmem:[%s8 + $0x378] sm:$0xff]
  %v1427 = vld [vmem:[%s8 + $0x380] sm:$0xff]
  %v1428 = vld [vmem:[%s8 + $0x388] sm:$0xff]
  %v1429 = vld [vmem:[%s8 + $0x390] sm:$0xff]
  %v1430 = vld [vmem:[%s8 + $0x398] sm:$0xff]
  %v1431 = vld [vmem:[%s8 + $0x3a0] sm:$0xff]
  %v1432 = vld [vmem:[%s8 + $0x3a8] sm:$0xff]
  %v1433 = vld [vmem:[%s8 + $0x3b0] sm:$0xff]
  %v1434 = vld [vmem:[%s8 + $0x3b8] sm:$0xff]
  %v1435 = vld [vmem:[%s8 + $0x3c0] sm:$0xff]
  %v1436 = vld [vmem:[%s8 + $0x3c8] sm:$0xff]
  %v1437 = vld [vmem:[%s8 + $0x3d0] sm:$0xff]
  %v1438 = vld [vmem:[%s8 + $0x3d8] sm:$0xff]
  %v1439 = vld [vmem:[%s8 + $0x3e0] sm:$0xff]
  %v1440 = vld [vmem:[%s8 + $0x3e8] sm:$0xff]
  %v1441 = vld [vmem:[%s8 + $0x3f0] sm:$0xff]
  %v1442 = vld [vmem:[%s8 + $0x3f8] sm:$0xff]
  %v1443 = vld [vmem:[%s8 + $0x400] sm:$0xff]
  %v1444 = vld [vmem:[%s8 + $0x408] sm:$0xff]
  %v1445 = vld [vmem:[%s8 + $0x410] sm:$0xff]
  %v1446 = vld [vmem:[%s8 + $0x418] sm:$0xff]
  %v1447 = vld [vmem:[%s8 + $0x420] sm:$0xff]
  %v1448 = vld [vmem:[%s8 + $0x428] sm:$0xff]
  %v1449 = vld [vmem:[%s8 + $0x430] sm:$0xff]
  %v1450 = vld [vmem:[%s8 + $0x438] sm:$0xff]
  %v1451 = vld [vmem:[%s8 + $0x440] sm:$0xff]
  %v1452 = vld [vmem:[%s8 + $0x448] sm:$0xff]
  %v1453 = vld [vmem:[%s8 + $0x450] sm:$0xff]
  %v1454 = vld [vmem:[%s8 + $0x458] sm:$0xff]
  %v1455 = vld [vmem:[%s8 + $0x460] sm:$0xff]
  %v1456 = vld [vmem:[%s8 + $0x468] sm:$0xff]
  %v1457 = vld [vmem:[%s8 + $0x470] sm:$0xff]
  %v1458 = vld [vmem:[%s8 + $0x478] sm:$0xff]
  %v1459 = vld [vmem:[%s8 + $0x480] sm:$0xff]
  %v1460 = vld [vmem:[%s8 + $0x488] sm:$0xff]
  %v1461 = vld [vmem:[%s8 + $0x490] sm:$0xff]
  %v1462 = vld [vmem:[%s8 + $0x498] sm:$0xff]
  %v1463 = vld [vmem:[%s8 + $0x4a0] sm:$0xff]
  %v1464 = vld [vmem:[%s8 + $0x4a8] sm:$0xff]
  %v1465 = vld [vmem:[%s8 + $0x4b0] sm:$0xff]
  %v1466 = vld [vmem:[%s8 + $0x4b8] sm:$0xff]
  %v1467 = vld [vmem:[%s8 + $0x4c0] sm:$0xff]
  %v1468 = vld [vmem:[%s8 + $0x4c8] sm:$0xff]
  %v1469 = vld [vmem:[%s8 + $0x4d0] sm:$0xff]
  %v1470 = vld [vmem:[%s8 + $0x4d8] sm:$0xff]
  %v1471 = vld [vmem:[%s8 + $0x4e0] sm:$0xff]
  %v1472 = vld [vmem:[%s8 + $0x4e8] sm:$0xff]
  %v1473 = vld [vmem:[%s8 + $0x4f0] sm:$0xff]
  %v1474 = vld [vmem:[%s8 + $0x4f8] sm:$0xff]
  %v1475 = vld [vmem:[%s8 + $0x500] sm:$0xff]
  %v1476 = vld [vmem:[%s8 + $0x508] sm:$0xff]
  %v1477 = vld [vmem:[%s8 + $0x510] sm:$0xff]
  %v1478 = vld [vmem:[%s8 + $0x518] sm:$0xff]
  %v1479 = vld [vmem:[%s8 + $0x520] sm:$0xff]
  %v1480 = vld [vmem:[%s8 + $0x528] sm:$0xff]
  %v1481 = vld [vmem:[%s8 + $0x530] sm:$0xff]
  %v1482 = vld [vmem:[%s8 + $0x538] sm:$0xff]
  %v1483 = vld [vmem:[%s8 + $0x540] sm:$0xff]
  %v1484 = vld [vmem:[%s8 + $0x548] sm:$0xff]
  %v1485 = vld [vmem:[%s8 + $0x550] sm:$0xff]
  %v1486 = vld [vmem:[%s8 + $0x558] sm:$0xff]
  %v1487 = vld [vmem:[%s8 + $0x560] sm:$0xff]
  %v1488 = vld [vmem:[%s8 + $0x568] sm:$0xff]
  %v1489 = vld [vmem:[%s8 + $0x570] sm:$0xff]
  %v1490 = vld [vmem:[%s8 + $0x578] sm:$0xff]
  %v1491 = vld [vmem:[%s8 + $0x580] sm:$0xff]
  %v1492 = vld [vmem:[%s8 + $0x588] sm:$0xff]
  %v1493 = vld [vmem:[%s8 + $0x590] sm:$0xff]
  %v1494 = vld [vmem:[%s8 + $0x598] sm:$0xff]
  %v1495 = vld [vmem:[%s8 + $0x5a0] sm:$0xff]
  %v1496 = vld [vmem:[%s8 + $0x5a8] sm:$0xff]
  %v1497 = vld [vmem:[%s8 + $0x5b0] sm:$0xff]
  %v1498 = vld [vmem:[%s8 + $0x5b8] sm:$0xff]
  %v1499 = vld [vmem:[%s8 + $0x5c0] sm:$0xff]
  %v1500 = vld [vmem:[%s8 + $0x5c8] sm:$0xff]
  %v1501 = vld [vmem:[%s8 + $0x5d0] sm:$0xff]
  %v1502 = vld [vmem:[%s8 + $0x5d8] sm:$0xff]
  %v1503 = vld [vmem:[%s8 + $0x5e0] sm:$0xff]
  %v1504 = vld [vmem:[%s8 + $0x5e8] sm:$0xff]
  %v1505 = vld [vmem:[%s8 + $0x5f0] sm:$0xff]
  %v1506 = vld [vmem:[%s8 + $0x5f8] sm:$0xff]
  %v1507 = vld [vmem:[%s8 + $0x600] sm:$0xff]
  %v1508 = vld [vmem:[%s8 + $0x608] sm:$0xff]
  %v1509 = vld [vmem:[%s8 + $0x610] sm:$0xff]
  %v1510 = vld [vmem:[%s8 + $0x618] sm:$0xff]
  %v1511 = vld [vmem:[%s8 + $0x620] sm:$0xff]
  %v1512 = vld [vmem:[%s8 + $0x628] sm:$0xff]
  %v1513 = vld [vmem:[%s8 + $0x630] sm:$0xff]
  %v1514 = vld [vmem:[%s8 + $0x638] sm:$0xff]
  %v1515 = vld [vmem:[%s8 + $0x640] sm:$0xff]
  %v1516 = vld [vmem:[%s8 + $0x648] sm:$0xff]
  %v1517 = vld [vmem:[%s8 + $0x650] sm:$0xff]
  %v1518 = vld [vmem:[%s8 + $0x658] sm:$0xff]
  %v1519 = vld [vmem:[%s8 + $0x660] sm:$0xff]
  %v1520 = vld [vmem:[%s8 + $0x668] sm:$0xff]
  %v1521 = vld [vmem:[%s8 + $0x670] sm:$0xff]
  %v1522 = vld [vmem:[%s8 + $0x678] sm:$0xff]
  %v1523 = vld [vmem:[%s8 + $0x680] sm:$0xff]
  %v1524 = vld [vmem:[%s8 + $0x688] sm:$0xff]
  %v1525 = vld [vmem:[%s8 + $0x690] sm:$0xff]
  %v1526 = vld [vmem:[%s8 + $0x698] sm:$0xff]
  %v1527 = vld [vmem:[%s8 + $0x6a0] sm:$0xff]
  %v1528 = vld [vmem:[%s8 + $0x6a8] sm:$0xff]
  %v1529 = vld [vmem:[%s8 + $0x6b0] sm:$0xff]
  %v1530 = vld [vmem:[%s8 + $0x6b8] sm:$0xff]
  %v1531 = vld [vmem:[%s8 + $0x6c0] sm:$0xff]
  %v1532 = vld [vmem:[%s8 + $0x6c8] sm:$0xff]
  %v1533 = vld [vmem:[%s8 + $0x6d0] sm:$0xff]
  %v1534 = vld [vmem:[%s8 + $0x6d8] sm:$0xff]
  %v1535 = vld [vmem:[%s8 + $0x6e0] sm:$0xff]
  %v1536 = vld [vmem:[%s8 + $0x6e8] sm:$0xff]
  %v1537 = vld [vmem:[%s8 + $0x6f0] sm:$0xff]
  %v1538 = vld [vmem:[%s8 + $0x6f8] sm:$0xff]
  %v1539 = vld [vmem:[%s8 + $0x700] sm:$0xff]
  %v1540 = vld [vmem:[%s8 + $0x708] sm:$0xff]
  %v1541 = vld [vmem:[%s8 + $0x710] sm:$0xff]
  %v1542 = vld [vmem:[%s8 + $0x718] sm:$0xff]
  %v1543 = vld [vmem:[%s8 + $0x720] sm:$0xff]
  %v1544 = vld [vmem:[%s8 + $0x728] sm:$0xff]
  %v1545 = vld [vmem:[%s8 + $0x730] sm:$0xff]
  %v1546 = vld [vmem:[%s8 + $0x738] sm:$0xff]
  %v1547 = vld [vmem:[%s8 + $0x740] sm:$0xff]
  %v1548 = vld [vmem:[%s8 + $0x748] sm:$0xff]
  %v1549 = vld [vmem:[%s8 + $0x750] sm:$0xff]
  %v1550 = vld [vmem:[%s8 + $0x758] sm:$0xff]
  %v1551 = vld [vmem:[%s8 + $0x760] sm:$0xff]
  %v1552 = vld [vmem:[%s8 + $0x768] sm:$0xff]
  %v1553 = vld [vmem:[%s8 + $0x770] sm:$0xff]
  %v1554 = vld [vmem:[%s8 + $0x778] sm:$0xff]
  %v1555 = vld [vmem:[%s8 + $0x780] sm:$0xff]
  %v1556 = vld [vmem:[%s8 + $0x788] sm:$0xff]
  %v1557 = vld [vmem:[%s8 + $0x790] sm:$0xff]
  %v1558 = vld [vmem:[%s8 + $0x798] sm:$0xff]
  %v1559 = vld [vmem:[%s8 + $0x7a0] sm:$0xff]
  %v1560 = vld [vmem:[%s8 + $0x7a8] sm:$0xff]
  %v1561 = vld [vmem:[%s8 + $0x7b0] sm:$0xff]
  %v1562 = vld [vmem:[%s8 + $0x7b8] sm:$0xff]
  %v1563 = vld [vmem:[%s8 + $0x7c0] sm:$0xff]
  %v1564 = vld [vmem:[%s8 + $0x7c8] sm:$0xff]
  %v1565 = vld [vmem:[%s8 + $0x7d0] sm:$0xff]
  %v1566 = vld [vmem:[%s8 + $0x7d8] sm:$0xff]
  %v1567 = vld [vmem:[%s8 + $0x7e0] sm:$0xff]
  %v1568 = vld [vmem:[%s8 + $0x7e8] sm:$0xff]
  %v1569 = vld [vmem:[%s8 + $0x7f0] sm:$0xff]
  %v1570 = vld [vmem:[%s8 + $0x7f8] sm:$0xff]
  %v1571 = vld [vmem:[%s2 + $0x8] sm:$0x1]
  %v1572 = vperm.slane %v1571, 0
  %1573 = vmatpush.msra.mxu0 %v1330
  %1574 = vmatpush.msra.mxu0 %v1329
  %1575 = vmatpush.msra.mxu0 %v1328
  %1576 = vmatpush.msra.mxu0 %v1327
  %1577 = vmatpush.msra.mxu0 %v1326
  %1578 = vmatpush.msra.mxu0 %v1325
  %1579 = vmatpush.msra.mxu0 %v1324
  %1580 = vmatpush.msra.mxu0 %v1323
  %1581 = vmatpush.msra.mxu0 %v1322
  %1582 = vmatpush.msra.mxu0 %v1321
  %1583 = vmatpush.msra.mxu0 %v1320
  %1584 = vmatpush.msra.mxu0 %v1319
  %1585 = vmatpush.msra.mxu0 %v1318
  %1586 = vmatpush.msra.mxu0 %v1317
  %1587 = vmatpush.msra.mxu0 %v1316
  %1588 = vmatpush.msra.mxu0 %v1315
  %1589 = vmatmul.f32.gmra.mxu0 %v1283
  %v1590 = vpop.f32.mrf.mxu0
  %v1591 = vadd.f32 %v1572, %v1590
  %1592 = vmatmul.f32.gmra.mxu0 %v1299
  %v1593 = vpop.f32.mrf.mxu0
  %v1594 = vadd.f32 %v1572, %v1593
  %1595 = vdwg.mxu0
  %1596 = vmatpush.msra.mxu0 %v1346
  %1597 = vmatpush.msra.mxu0 %v1345
  %1598 = vmatpush.msra.mxu0 %v1344
  %1599 = vmatpush.msra.mxu0 %v1343
  %1600 = vmatpush.msra.mxu0 %v1342
  %1601 = vmatpush.msra.mxu0 %v1341
  %1602 = vmatpush.msra.mxu0 %v1340
  %1603 = vmatpush.msra.mxu0 %v1339
  %1604 = vmatpush.msra.mxu0 %v1338
  %1605 = vmatpush.msra.mxu0 %v1337
  %1606 = vmatpush.msra.mxu0 %v1336
  %1607 = vmatpush.msra.mxu0 %v1335
  %1608 = vmatpush.msra.mxu0 %v1334
  %1609 = vmatpush.msra.mxu0 %v1333
  %1610 = vmatpush.msra.mxu0 %v1332
  %1611 = vmatpush.msra.mxu0 %v1331
  %1612 = vmatmul.f32.gmra.mxu0 %v1284
  %v1613 = vpop.f32.mrf.mxu0
  %v1614 = vadd.f32 %v1591, %v1613
  %1615 = vmatmul.f32.gmra.mxu0 %v1300
  %v1616 = vpop.f32.mrf.mxu0
  %v1617 = vadd.f32 %v1594, %v1616
  %1618 = vdwg.mxu0
  %1619 = vmatpush.msra.mxu0 %v1362
  %1620 = vmatpush.msra.mxu0 %v1361
  %1621 = vmatpush.msra.mxu0 %v1360
  %1622 = vmatpush.msra.mxu0 %v1359
  %1623 = vmatpush.msra.mxu0 %v1358
  %1624 = vmatpush.msra.mxu0 %v1357
  %1625 = vmatpush.msra.mxu0 %v1356
  %1626 = vmatpush.msra.mxu0 %v1355
  %1627 = vmatpush.msra.mxu0 %v1354
  %1628 = vmatpush.msra.mxu0 %v1353
  %1629 = vmatpush.msra.mxu0 %v1352
  %1630 = vmatpush.msra.mxu0 %v1351
  %1631 = vmatpush.msra.mxu0 %v1350
  %1632 = vmatpush.msra.mxu0 %v1349
  %1633 = vmatpush.msra.mxu0 %v1348
  %1634 = vmatpush.msra.mxu0 %v1347
  %1635 = vmatmul.f32.gmra.mxu0 %v1285
  %v1636 = vpop.f32.mrf.mxu0
  %v1637 = vadd.f32 %v1614, %v1636
  %1638 = vmatmul.f32.gmra.mxu0 %v1301
  %v1639 = vpop.f32.mrf.mxu0
  %v1640 = vadd.f32 %v1617, %v1639
  %1641 = vdwg.mxu0
  %1642 = vmatpush.msra.mxu0 %v1378
  %1643 = vmatpush.msra.mxu0 %v1377
  %1644 = vmatpush.msra.mxu0 %v1376
  %1645 = vmatpush.msra.mxu0 %v1375
  %1646 = vmatpush.msra.mxu0 %v1374
  %1647 = vmatpush.msra.mxu0 %v1373
  %1648 = vmatpush.msra.mxu0 %v1372
  %1649 = vmatpush.msra.mxu0 %v1371
  %1650 = vmatpush.msra.mxu0 %v1370
  %1651 = vmatpush.msra.mxu0 %v1369
  %1652 = vmatpush.msra.mxu0 %v1368
  %1653 = vmatpush.msra.mxu0 %v1367
  %1654 = vmatpush.msra.mxu0 %v1366
  %1655 = vmatpush.msra.mxu0 %v1365
  %1656 = vmatpush.msra.mxu0 %v1364
  %1657 = vmatpush.msra.mxu0 %v1363
  %1658 = vmatmul.f32.gmra.mxu0 %v1286
  %v1659 = vpop.f32.mrf.mxu0
  %v1660 = vadd.f32 %v1637, %v1659
  %1661 = vmatmul.f32.gmra.mxu0 %v1302
  %v1662 = vpop.f32.mrf.mxu0
  %v1663 = vadd.f32 %v1640, %v1662
  %1664 = vdwg.mxu0
  %1665 = vmatpush.msra.mxu0 %v1394
  %1666 = vmatpush.msra.mxu0 %v1393
  %1667 = vmatpush.msra.mxu0 %v1392
  %1668 = vmatpush.msra.mxu0 %v1391
  %1669 = vmatpush.msra.mxu0 %v1390
  %1670 = vmatpush.msra.mxu0 %v1389
  %1671 = vmatpush.msra.mxu0 %v1388
  %1672 = vmatpush.msra.mxu0 %v1387
  %1673 = vmatpush.msra.mxu0 %v1386
  %1674 = vmatpush.msra.mxu0 %v1385
  %1675 = vmatpush.msra.mxu0 %v1384
  %1676 = vmatpush.msra.mxu0 %v1383
  %1677 = vmatpush.msra.mxu0 %v1382
  %1678 = vmatpush.msra.mxu0 %v1381
  %1679 = vmatpush.msra.mxu0 %v1380
  %1680 = vmatpush.msra.mxu0 %v1379
  %1681 = vmatmul.f32.gmra.mxu0 %v1287
  %v1682 = vpop.f32.mrf.mxu0
  %v1683 = vadd.f32 %v1660, %v1682
  %1684 = vmatmul.f32.gmra.mxu0 %v1303
  %v1685 = vpop.f32.mrf.mxu0
  %v1686 = vadd.f32 %v1663, %v1685
  %1687 = vdwg.mxu0
  %1688 = vmatpush.msra.mxu0 %v1410
  %1689 = vmatpush.msra.mxu0 %v1409
  %1690 = vmatpush.msra.mxu0 %v1408
  %1691 = vmatpush.msra.mxu0 %v1407
  %1692 = vmatpush.msra.mxu0 %v1406
  %1693 = vmatpush.msra.mxu0 %v1405
  %1694 = vmatpush.msra.mxu0 %v1404
  %1695 = vmatpush.msra.mxu0 %v1403
  %1696 = vmatpush.msra.mxu0 %v1402
  %1697 = vmatpush.msra.mxu0 %v1401
  %1698 = vmatpush.msra.mxu0 %v1400
  %1699 = vmatpush.msra.mxu0 %v1399
  %1700 = vmatpush.msra.mxu0 %v1398
  %1701 = vmatpush.msra.mxu0 %v1397
  %1702 = vmatpush.msra.mxu0 %v1396
  %1703 = vmatpush.msra.mxu0 %v1395
  %1704 = vmatmul.f32.gmra.mxu0 %v1288
  %v1705 = vpop.f32.mrf.mxu0
  %v1706 = vadd.f32 %v1683, %v1705
  %1707 = vmatmul.f32.gmra.mxu0 %v1304
  %v1708 = vpop.f32.mrf.mxu0
  %v1709 = vadd.f32 %v1686, %v1708
  %1710 = vdwg.mxu0
  %1711 = vmatpush.msra.mxu0 %v1426
  %1712 = vmatpush.msra.mxu0 %v1425
  %1713 = vmatpush.msra.mxu0 %v1424
  %1714 = vmatpush.msra.mxu0 %v1423
  %1715 = vmatpush.msra.mxu0 %v1422
  %1716 = vmatpush.msra.mxu0 %v1421
  %1717 = vmatpush.msra.mxu0 %v1420
  %1718 = vmatpush.msra.mxu0 %v1419
  %1719 = vmatpush.msra.mxu0 %v1418
  %1720 = vmatpush.msra.mxu0 %v1417
  %1721 = vmatpush.msra.mxu0 %v1416
  %1722 = vmatpush.msra.mxu0 %v1415
  %1723 = vmatpush.msra.mxu0 %v1414
  %1724 = vmatpush.msra.mxu0 %v1413
  %1725 = vmatpush.msra.mxu0 %v1412
  %1726 = vmatpush.msra.mxu0 %v1411
  %1727 = vmatmul.f32.gmra.mxu0 %v1289
  %v1728 = vpop.f32.mrf.mxu0
  %v1729 = vadd.f32 %v1706, %v1728
  %1730 = vmatmul.f32.gmra.mxu0 %v1305
  %v1731 = vpop.f32.mrf.mxu0
  %v1732 = vadd.f32 %v1709, %v1731
  %1733 = vdwg.mxu0
  %1734 = vmatpush.msra.mxu0 %v1442
  %1735 = vmatpush.msra.mxu0 %v1441
  %1736 = vmatpush.msra.mxu0 %v1440
  %1737 = vmatpush.msra.mxu0 %v1439
  %1738 = vmatpush.msra.mxu0 %v1438
  %1739 = vmatpush.msra.mxu0 %v1437
  %1740 = vmatpush.msra.mxu0 %v1436
  %1741 = vmatpush.msra.mxu0 %v1435
  %1742 = vmatpush.msra.mxu0 %v1434
  %1743 = vmatpush.msra.mxu0 %v1433
  %1744 = vmatpush.msra.mxu0 %v1432
  %1745 = vmatpush.msra.mxu0 %v1431
  %1746 = vmatpush.msra.mxu0 %v1430
  %1747 = vmatpush.msra.mxu0 %v1429
  %1748 = vmatpush.msra.mxu0 %v1428
  %1749 = vmatpush.msra.mxu0 %v1427
  %1750 = vmatmul.f32.gmra.mxu0 %v1290
  %v1751 = vpop.f32.mrf.mxu0
  %v1752 = vadd.f32 %v1729, %v1751
  %1753 = vmatmul.f32.gmra.mxu0 %v1306
  %v1754 = vpop.f32.mrf.mxu0
  %v1755 = vadd.f32 %v1732, %v1754
  %1756 = vdwg.mxu0
  %1757 = vmatpush.msra.mxu0 %v1458
  %1758 = vmatpush.msra.mxu0 %v1457
  %1759 = vmatpush.msra.mxu0 %v1456
  %1760 = vmatpush.msra.mxu0 %v1455
  %1761 = vmatpush.msra.mxu0 %v1454
  %1762 = vmatpush.msra.mxu0 %v1453
  %1763 = vmatpush.msra.mxu0 %v1452
  %1764 = vmatpush.msra.mxu0 %v1451
  %1765 = vmatpush.msra.mxu0 %v1450
  %1766 = vmatpush.msra.mxu0 %v1449
  %1767 = vmatpush.msra.mxu0 %v1448
  %1768 = vmatpush.msra.mxu0 %v1447
  %1769 = vmatpush.msra.mxu0 %v1446
  %1770 = vmatpush.msra.mxu0 %v1445
  %1771 = vmatpush.msra.mxu0 %v1444
  %1772 = vmatpush.msra.mxu0 %v1443
  %1773 = vmatmul.f32.gmra.mxu0 %v1291
  %v1774 = vpop.f32.mrf.mxu0
  %v1775 = vadd.f32 %v1752, %v1774
  %1776 = vmatmul.f32.gmra.mxu0 %v1307
  %v1777 = vpop.f32.mrf.mxu0
  %v1778 = vadd.f32 %v1755, %v1777
  %1779 = vdwg.mxu0
  %1780 = vmatpush.msra.mxu0 %v1474
  %1781 = vmatpush.msra.mxu0 %v1473
  %1782 = vmatpush.msra.mxu0 %v1472
  %1783 = vmatpush.msra.mxu0 %v1471
  %1784 = vmatpush.msra.mxu0 %v1470
  %1785 = vmatpush.msra.mxu0 %v1469
  %1786 = vmatpush.msra.mxu0 %v1468
  %1787 = vmatpush.msra.mxu0 %v1467
  %1788 = vmatpush.msra.mxu0 %v1466
  %1789 = vmatpush.msra.mxu0 %v1465
  %1790 = vmatpush.msra.mxu0 %v1464
  %1791 = vmatpush.msra.mxu0 %v1463
  %1792 = vmatpush.msra.mxu0 %v1462
  %1793 = vmatpush.msra.mxu0 %v1461
  %1794 = vmatpush.msra.mxu0 %v1460
  %1795 = vmatpush.msra.mxu0 %v1459
  %1796 = vmatmul.f32.gmra.mxu0 %v1292
  %v1797 = vpop.f32.mrf.mxu0
  %v1798 = vadd.f32 %v1775, %v1797
  %1799 = vmatmul.f32.gmra.mxu0 %v1308
  %v1800 = vpop.f32.mrf.mxu0
  %v1801 = vadd.f32 %v1778, %v1800
  %1802 = vdwg.mxu0
  %1803 = vmatpush.msra.mxu0 %v1490
  %1804 = vmatpush.msra.mxu0 %v1489
  %1805 = vmatpush.msra.mxu0 %v1488
  %1806 = vmatpush.msra.mxu0 %v1487
  %1807 = vmatpush.msra.mxu0 %v1486
  %1808 = vmatpush.msra.mxu0 %v1485
  %1809 = vmatpush.msra.mxu0 %v1484
  %1810 = vmatpush.msra.mxu0 %v1483
  %1811 = vmatpush.msra.mxu0 %v1482
  %1812 = vmatpush.msra.mxu0 %v1481
  %1813 = vmatpush.msra.mxu0 %v1480
  %1814 = vmatpush.msra.mxu0 %v1479
  %1815 = vmatpush.msra.mxu0 %v1478
  %1816 = vmatpush.msra.mxu0 %v1477
  %1817 = vmatpush.msra.mxu0 %v1476
  %1818 = vmatpush.msra.mxu0 %v1475
  %1819 = vmatmul.f32.gmra.mxu0 %v1293
  %v1820 = vpop.f32.mrf.mxu0
  %v1821 = vadd.f32 %v1798, %v1820
  %1822 = vmatmul.f32.gmra.mxu0 %v1309
  %v1823 = vpop.f32.mrf.mxu0
  %v1824 = vadd.f32 %v1801, %v1823
  %1825 = vdwg.mxu0
  %1826 = vmatpush.msra.mxu0 %v1506
  %1827 = vmatpush.msra.mxu0 %v1505
  %1828 = vmatpush.msra.mxu0 %v1504
  %1829 = vmatpush.msra.mxu0 %v1503
  %1830 = vmatpush.msra.mxu0 %v1502
  %1831 = vmatpush.msra.mxu0 %v1501
  %1832 = vmatpush.msra.mxu0 %v1500
  %1833 = vmatpush.msra.mxu0 %v1499
  %1834 = vmatpush.msra.mxu0 %v1498
  %1835 = vmatpush.msra.mxu0 %v1497
  %1836 = vmatpush.msra.mxu0 %v1496
  %1837 = vmatpush.msra.mxu0 %v1495
  %1838 = vmatpush.msra.mxu0 %v1494
  %1839 = vmatpush.msra.mxu0 %v1493
  %1840 = vmatpush.msra.mxu0 %v1492
  %1841 = vmatpush.msra.mxu0 %v1491
  %1842 = vmatmul.f32.gmra.mxu0 %v1294
  %v1843 = vpop.f32.mrf.mxu0
  %v1844 = vadd.f32 %v1821, %v1843
  %1845 = vmatmul.f32.gmra.mxu0 %v1310
  %v1846 = vpop.f32.mrf.mxu0
  %v1847 = vadd.f32 %v1824, %v1846
  %1848 = vdwg.mxu0
  %1849 = vmatpush.msra.mxu0 %v1522
  %1850 = vmatpush.msra.mxu0 %v1521
  %1851 = vmatpush.msra.mxu0 %v1520
  %1852 = vmatpush.msra.mxu0 %v1519
  %1853 = vmatpush.msra.mxu0 %v1518
  %1854 = vmatpush.msra.mxu0 %v1517
  %1855 = vmatpush.msra.mxu0 %v1516
  %1856 = vmatpush.msra.mxu0 %v1515
  %1857 = vmatpush.msra.mxu0 %v1514
  %1858 = vmatpush.msra.mxu0 %v1513
  %1859 = vmatpush.msra.mxu0 %v1512
  %1860 = vmatpush.msra.mxu0 %v1511
  %1861 = vmatpush.msra.mxu0 %v1510
  %1862 = vmatpush.msra.mxu0 %v1509
  %1863 = vmatpush.msra.mxu0 %v1508
  %1864 = vmatpush.msra.mxu0 %v1507
  %1865 = vmatmul.f32.gmra.mxu0 %v1295
  %v1866 = vpop.f32.mrf.mxu0
  %v1867 = vadd.f32 %v1844, %v1866
  %1868 = vmatmul.f32.gmra.mxu0 %v1311
  %v1869 = vpop.f32.mrf.mxu0
  %v1870 = vadd.f32 %v1847, %v1869
  %1871 = vdwg.mxu0
  %1872 = vmatpush.msra.mxu0 %v1538
  %1873 = vmatpush.msra.mxu0 %v1537
  %1874 = vmatpush.msra.mxu0 %v1536
  %1875 = vmatpush.msra.mxu0 %v1535
  %1876 = vmatpush.msra.mxu0 %v1534
  %1877 = vmatpush.msra.mxu0 %v1533
  %1878 = vmatpush.msra.mxu0 %v1532
  %1879 = vmatpush.msra.mxu0 %v1531
  %1880 = vmatpush.msra.mxu0 %v1530
  %1881 = vmatpush.msra.mxu0 %v1529
  %1882 = vmatpush.msra.mxu0 %v1528
  %1883 = vmatpush.msra.mxu0 %v1527
  %1884 = vmatpush.msra.mxu0 %v1526
  %1885 = vmatpush.msra.mxu0 %v1525
  %1886 = vmatpush.msra.mxu0 %v1524
  %1887 = vmatpush.msra.mxu0 %v1523
  %1888 = vmatmul.f32.gmra.mxu0 %v1296
  %v1889 = vpop.f32.mrf.mxu0
  %v1890 = vadd.f32 %v1867, %v1889
  %1891 = vmatmul.f32.gmra.mxu0 %v1312
  %v1892 = vpop.f32.mrf.mxu0
  %v1893 = vadd.f32 %v1870, %v1892
  %1894 = vdwg.mxu0
  %1895 = vmatpush.msra.mxu0 %v1554
  %1896 = vmatpush.msra.mxu0 %v1553
  %1897 = vmatpush.msra.mxu0 %v1552
  %1898 = vmatpush.msra.mxu0 %v1551
  %1899 = vmatpush.msra.mxu0 %v1550
  %1900 = vmatpush.msra.mxu0 %v1549
  %1901 = vmatpush.msra.mxu0 %v1548
  %1902 = vmatpush.msra.mxu0 %v1547
  %1903 = vmatpush.msra.mxu0 %v1546
  %1904 = vmatpush.msra.mxu0 %v1545
  %1905 = vmatpush.msra.mxu0 %v1544
  %1906 = vmatpush.msra.mxu0 %v1543
  %1907 = vmatpush.msra.mxu0 %v1542
  %1908 = vmatpush.msra.mxu0 %v1541
  %1909 = vmatpush.msra.mxu0 %v1540
  %1910 = vmatpush.msra.mxu0 %v1539
  %1911 = vmatmul.f32.gmra.mxu0 %v1297
  %v1912 = vpop.f32.mrf.mxu0
  %v1913 = vadd.f32 %v1890, %v1912
  %1914 = vmatmul.f32.gmra.mxu0 %v1313
  %v1915 = vpop.f32.mrf.mxu0
  %v1916 = vadd.f32 %v1893, %v1915
  %1917 = vdwg.mxu0
  %1918 = vmatpush.msra.mxu0 %v1570
  %1919 = vmatpush.msra.mxu0 %v1569
  %1920 = vmatpush.msra.mxu0 %v1568
  %1921 = vmatpush.msra.mxu0 %v1567
  %1922 = vmatpush.msra.mxu0 %v1566
  %1923 = vmatpush.msra.mxu0 %v1565
  %1924 = vmatpush.msra.mxu0 %v1564
  %1925 = vmatpush.msra.mxu0 %v1563
  %1926 = vmatpush.msra.mxu0 %v1562
  %1927 = vmatpush.msra.mxu0 %v1561
  %1928 = vmatpush.msra.mxu0 %v1560
  %1929 = vmatpush.msra.mxu0 %v1559
  %1930 = vmatpush.msra.mxu0 %v1558
  %1931 = vmatpush.msra.mxu0 %v1557
  %1932 = vmatpush.msra.mxu0 %v1556
  %1933 = vmatpush.msra.mxu0 %v1555
  %1934 = vmatmul.f32.gmra.mxu0 %v1298
  %v1935 = vpop.f32.mrf.mxu0
  %v1936 = vadd.f32 %v1913, %v1935
  %1937 = vmatmul.f32.gmra.mxu0 %v1314
  %v1938 = vpop.f32.mrf.mxu0
  %v1939 = vadd.f32 %v1916, %v1938
  %1940 = vdwg.mxu0
  %v1941 = vadd.f32 %v807, %v1936
  %v1942 = vadd.f32 %v808, %v1939
  %v1943 = vld [vmem:[%s2 + $0xd] sm:$0x1]
  %v1944 = vld [vmem:[%s2 + $0xe] sm:$0x1]
  %v1945 = vsel %vm76, %v1941, 0.0
  %1946 = vadd.xlane.f32.xlu0 %v1945
  %v1947 = vpop.xlane.xlu0 %1946
  %v1948 = vsel %vm76, %v1942, 0.0
  %1949 = vadd.xlane.f32.xlu0 %v1948
  %v1950 = vpop.xlane.xlu0 %1949
  %v1951 = vmul.f32 %v1947, %v365
  %v1952 = vmul.f32 %v1950, %v365
  %v1953 = vsub.f32 %v1941, %v1951
  %v1954 = vsub.f32 %v1942, %v1952
  %v1955 = vmul.f32 %v1953, %v1953
  %v1956 = vmul.f32 %v1954, %v1954
  %v1957 = vsel %vm76, %v1955, 0.0
  %1958 = vadd.xlane.f32.xlu0 %v1957
  %v1959 = vpop.xlane.xlu0 %1958
  %v1960 = vsel %vm76, %v1956, 0.0
  %1961 = vadd.xlane.f32.xlu0 %v1960
  %v1962 = vpop.xlane.xlu0 %1961
  %v1963 = vmul.f32 %v1959, %v365
  %v1964 = vmul.f32 %v1962, %v365
  %v1965 = vadd.f32 %v1963, 1e-05
  %v1966 = vadd.f32 %v1964, 1e-05
  %v1967 = vrsqrt.pop %v1965
  %v1968 = vmul.f32 %v1967, %v1965
  %v1969 = vmul.f32 %v1968, %v1967
  %v1970 = vmul.f32 0.5, %v1969
  %v1971 = vsub.f32 1.5, %v1970
  %v1972 = vmul.f32 %v1967, %v1971
  %vm1973 = vweird.f32 %v1965
  %vm1974 = vweird.f32 %v1967
  %vm1975 = vmor %vm1973, %vm1974
  %v1976 = vsel %vm1975, %v1967, %v1972
  %v1977 = vrsqrt.pop %v1966
  %v1978 = vmul.f32 %v1977, %v1966
  %v1979 = vmul.f32 %v1978, %v1977
  %v1980 = vmul.f32 0.5, %v1979
  %v1981 = vsub.f32 1.5, %v1980
  %v1982 = vmul.f32 %v1977, %v1981
  %vm1983 = vweird.f32 %v1966
  %vm1984 = vweird.f32 %v1977
  %vm1985 = vmor %vm1983, %vm1984
  %v1986 = vsel %vm1985, %v1977, %v1982
  %v1987 = vmul.f32 %v1953, %v1976
  %v1988 = vmul.f32 %v1954, %v1986
  %v1989 = vperm.slane %v1943, 0
  %v1990 = vmul.f32 %v1987, %v1989
  %v1991 = vmul.f32 %v1988, %v1989
  %v1992 = vperm.slane %v1944, 0
  %v1993 = vadd.f32 %v1990, %v1992
  %v1994 = vadd.f32 %v1991, %v1992
  %1995 = vst.msk [vmem:[%s9] sm:$0xff] %vm76, %v1993
  %1996 = vst.msk [vmem:[%s9 + $0x8] sm:$0xff] %vm76, %v1994
  // Predicated region
  $region38: #{fwd.1} parent=0 // pred_check
    _
  $region39: #{fwd.1} parent=0 // pred_check_branch
    %1998 = sbr.rel (0) target = $region41
  $region40: #{fwd.1} parent=0 // pred_region
    _
  $region41: #{fwd.1} parent=0 // pred_fallthru
    _
  // Predicated region
  $region42: #{fwd.1} parent=0 // pred_check
    _
  $region43: #{fwd.1} parent=0 // pred_check_branch
    %2000 = sbr.rel (0) target = $region45
  $region44: #{fwd.1} parent=0 // pred_region
    _
  $region45: #{fwd.1} parent=0 // pred_fallthru
    _

</llo_original>
